<compile_context>
chip_gen: v5e
topology: v5e:2x2
jax: 0.10.0
libtpu: 0.0.40
codegen_flags: <defaults>
</compile_context>

<pallas_src>
import jax
import jax.numpy as jnp
from jax.experimental import pallas as pl
from jax.experimental.pallas import tpu as pltpu


def _round_up(v, m):
    return (v + m - 1) // m * m


def _mlp_kernel(x_ref, w1_ref, b1_ref, w2_ref, b2_ref, o_ref):
    # Layer 1: h = relu(x @ W1^T + b1).  x / W1^T are bf16 MXU operands; the matmul
    # accumulates in f32 and the bias-add / ReLU run on the VPU in f32 (v5e-safe).
    h = jnp.dot(x_ref[...], w1_ref[...], preferred_element_type=jnp.float32)
    h = jnp.maximum(h + b1_ref[...], 0.0)

    # Layer 2: y = h @ W2^T + b2.  Re-quantize the activations to the weight dtype
    # for the MXU; accumulate in f32 and add the bias in f32.
    y = jnp.dot(h.astype(w2_ref.dtype), w2_ref[...], preferred_element_type=jnp.float32)
    o_ref[...] = (y + b2_ref[...]).astype(o_ref.dtype)


def _vmem_budget_bytes():
    """Per-TensorCore VMEM budget with headroom for compiler-internal scratch."""
    try:
        cap = int(pltpu.get_tpu_info().vmem_capacity_bytes)
    except Exception:
        cap = 64 * 1024 * 1024  # v7x per-TC physical VMEM: smallest across generations.
    return min(int(cap * 2 // 3), 96 * 1024 * 1024)


def _choose_tile_n(n, d_in, h_p, d_out_p, *, x_itemsize, w_itemsize, vmem_budget,
                   max_tile=1024):
    """Largest batch tile (multiple of 256, capped at max_tile) that fits the budget."""
    # Resident, single-buffered weights + biases (per-TC copy on v7x megacore).
    resident = (d_in * h_p + h_p * d_out_p) * w_itemsize + (h_p + d_out_p) * 4
    # Per batch-row VMEM: double-buffered x tile, double-buffered f32 out tile,
    # plus the f32 hidden temporary.
    per_row = 2 * d_in * x_itemsize + 2 * d_out_p * 4 + h_p * 4
    avail = max(vmem_budget - resident, per_row * 8)
    fit = avail // per_row
    if fit >= max_tile:
        cap = max_tile
    elif fit >= 256:
        cap = (fit // 256) * 256
    else:
        cap = max(8, (fit // 8) * 8)
    if n <= cap:
        # Whole batch in one grid step -> per-step overhead paid exactly once.
        return int(_round_up(max(n, 8), 8))
    return int(cap)


def prepare_params(w1, b1, w2, b2, *, compute_dtype=jnp.bfloat16):
    """One-time weight prep (hoisted out of the hot path, i.e. "at module init"):

    * pad H and D_out up to lane-dense multiples of 128,
    * pre-transpose to [in, out] so the kernel is a plain [M,K]x[K,N] contraction,
    * cast weights to bf16 for the MXU (biases stay f32 for the VPU add).

    Zero padding keeps the valid [N, D_out] region exact.
    """
    h, d_in = w1.shape
    d_out = w2.shape[0]
    assert w2.shape[1] == h and b1.shape == (h,) and b2.shape == (d_out,)

    h_p = _round_up(h, 128)
    d_out_p = _round_up(d_out, 128)

    w1t = jnp.pad(w1, ((0, h_p - h), (0, 0))).T.astype(compute_dtype)              # [D_in, H_p]
    b1p = jnp.pad(b1, (0, h_p - h)).astype(jnp.float32).reshape(1, h_p)             # [1, H_p]
    w2t = jnp.pad(w2, ((0, d_out_p - d_out), (0, h_p - h))).T.astype(compute_dtype)  # [H_p, D_out_p]
    b2p = jnp.pad(b2, (0, d_out_p - d_out)).astype(jnp.float32).reshape(1, d_out_p)  # [1, D_out_p]

    return {"w1t": w1t, "b1": b1p, "w2t": w2t, "b2": b2p,
            "d_in": d_in, "d_out": d_out}


def two_layer_net(x, params, *, tile_n=None):
    """Fused forward pass: relu(x @ W1^T + b1) @ W2^T + b2.  x: [N, D_in] f32."""
    n, d_in = x.shape
    w1t, b1p, w2t, b2p = params["w1t"], params["b1"], params["w2t"], params["b2"]
    d_out = params["d_out"]
    assert d_in == params["d_in"]
    h_p = w1t.shape[1]
    d_out_p = w2t.shape[1]

    vmem_budget = _vmem_budget_bytes()
    if tile_n is None:
        tile_n = _choose_tile_n(
            n, d_in, h_p, d_out_p,
            x_itemsize=jnp.dtype(w1t.dtype).itemsize,
            w_itemsize=jnp.dtype(w1t.dtype).itemsize,
            vmem_budget=vmem_budget)

    n_p = _round_up(n, tile_n)

    # x is the only per-call prep: cast to the MXU operand dtype (halves its DMA into
    # the kernel) and pad batch rows only if the tile does not divide N.
    x_c = x.astype(w1t.dtype)
    if n_p != n:
        x_c = jnp.pad(x_c, ((0, n_p - n), (0, 0)))

    grid = (n_p // tile_n,)

    itemsize = jnp.dtype(w1t.dtype).itemsize
    flops = 2 * n_p * (d_in * h_p + h_p * d_out_p)
    bytes_accessed = (n_p * d_in * itemsize
                      + (d_in * h_p + h_p * d_out_p) * itemsize
                      + (h_p + d_out_p) * 4
                      + n_p * d_out_p * 4)

    # Weights / biases are constant across the grid: resident in VMEM and
    # single-buffered (pl.Buffered(1)) so they cost 1x, not 2x, of their size.
    resident_spec = lambda shape: pl.BlockSpec(shape, lambda i: (0, 0),
                                               pipeline_mode=pl.Buffered(1))

    y_p = pl.pallas_call(
        _mlp_kernel,
        out_shape=jax.ShapeDtypeStruct((n_p, d_out_p), jnp.float32),
        grid=grid,
        in_specs=[
            pl.BlockSpec((tile_n, d_in), lambda i: (i, 0)),   # x: streamed, double-buffered
            resident_spec((d_in, h_p)),                        # W1^T: weight-stationary
            resident_spec((1, h_p)),                           # b1
            resident_spec((h_p, d_out_p)),                     # W2^T: weight-stationary
            resident_spec((1, d_out_p)),                       # b2
        ],
        out_specs=pl.BlockSpec((tile_n, d_out_p), lambda i: (i, 0)),
        compiler_params=pltpu.CompilerParams(
            dimension_semantics=("parallel",),                 # batch tiles independent (megacore)
            vmem_limit_bytes=vmem_budget,
        ),
        cost_estimate=pl.CostEstimate(
            flops=flops, transcendentals=0, bytes_accessed=bytes_accessed),
    )(x_c, w1t, b1p, w2t, b2p)

    # Strip batch / D_out padding.
    return y_p[:n, :d_out]


if __name__ == "__main__":
    # Shapes consistent with TwoLayerNet(D_in, H, D_out) on x: [N, D_in].
    # N chosen so the auto-picked tile (<=1024 rows) gives a 2-step parallel grid.
    N, D_in, H, D_out = 2048, 64, 128, 32

    key = jax.random.PRNGKey(0)
    kx, kw1, kb1, kw2, kb2 = jax.random.split(key, 5)

    # x ~ N(0, 1), matching torch.empty(N, D_in).normal_(mean=0, std=1)
    x = jax.random.normal(kx, (N, D_in), dtype=jnp.float32)

    # Parameter init mimicking nn.Linear's U(-1/sqrt(fan_in), +1/sqrt(fan_in))
    bound1 = 1.0 / jnp.sqrt(jnp.float32(D_in))
    w1 = jax.random.uniform(kw1, (H, D_in), minval=-bound1, maxval=bound1, dtype=jnp.float32)
    b1 = jax.random.uniform(kb1, (H,), minval=-bound1, maxval=bound1, dtype=jnp.float32)

    bound2 = 1.0 / jnp.sqrt(jnp.float32(H))
    w2 = jax.random.uniform(kw2, (D_out, H), minval=-bound2, maxval=bound2, dtype=jnp.float32)
    b2 = jax.random.uniform(kb2, (D_out,), minval=-bound2, maxval=bound2, dtype=jnp.float32)

    # One-time weight prep (pad / transpose / bf16 cast) outside the hot path.
    params = prepare_params(w1, b1, w2, b2)

    y = two_layer_net(x, params)
    jax.block_until_ready(y)

    # Reference check in plain f32 JAX (same torch.nn.Linear semantics).  Tolerance is
    # loosened vs. the pure-f32 kernel because matmul operands are bf16 (f32 accum).
    h_ref = jnp.maximum(x @ w1.T + b1, 0.0)
    y_ref = h_ref @ w2.T + b2
    assert y.shape == (N, D_out)
    assert jnp.allclose(y, y_ref, atol=5e-2, rtol=5e-2), float(jnp.max(jnp.abs(y - y_ref)))

    print("KERNEL_OK")
</pallas_src>

<mosaic_0001>
module attributes {stable_mosaic.version = 11 : i64} {
  func.func @_mlp_kernel(%arg0: i32, %arg1: memref<1024x64xbf16, #tpu.memory_space<vmem>>, %arg2: memref<64x128xbf16, #tpu.memory_space<vmem>>, %arg3: memref<1x128xf32, #tpu.memory_space<vmem>>, %arg4: memref<128x128xbf16, #tpu.memory_space<vmem>>, %arg5: memref<1x128xf32, #tpu.memory_space<vmem>>, %arg6: memref<1024x128xf32, #tpu.memory_space<vmem>>) attributes {dimension_semantics = [#tpu.dimension_semantics<parallel>], iteration_bounds = array<i64: 2>, scalar_prefetch = 0 : i64, scratch_operands = 0 : i64, tpu.core_type = #tpu.core_type<tc>, window_params = [{transform_indices = @transform_0, window_bounds = array<i64: 1024, 64>}, {pipeline_mode = #tpu.pipeline_mode<synchronous>, transform_indices = @transform_1, window_bounds = array<i64: 64, 128>}, {pipeline_mode = #tpu.pipeline_mode<synchronous>, transform_indices = @transform_2, window_bounds = array<i64: 1, 128>}, {pipeline_mode = #tpu.pipeline_mode<synchronous>, transform_indices = @transform_3, window_bounds = array<i64: 128, 128>}, {pipeline_mode = #tpu.pipeline_mode<synchronous>, transform_indices = @transform_4, window_bounds = array<i64: 1, 128>}, {transform_indices = @transform_5, window_bounds = array<i64: 1024, 128>}]} {
    %c0 = arith.constant 0 : index
    %c0_0 = arith.constant 0 : index
    %0 = vector.load %arg1[%c0, %c0_0] : memref<1024x64xbf16, #tpu.memory_space<vmem>>, vector<1024x64xbf16>
    %c0_1 = arith.constant 0 : index
    %c0_2 = arith.constant 0 : index
    %1 = vector.load %arg2[%c0_1, %c0_2] : memref<64x128xbf16, #tpu.memory_space<vmem>>, vector<64x128xbf16>
    %cst = arith.constant dense<0.000000e+00> : vector<1024x128xf32>
    %2 = tpu.matmul %0, %1, %cst {dimension_numbers = #tpu.dot_dimension_numbers<[1], [0], [0], [1], [0, 0, 1, 1], [], []>} : vector<1024x64xbf16>, vector<64x128xbf16>, vector<1024x128xf32> -> vector<1024x128xf32>
    %c0_3 = arith.constant 0 : index
    %c0_4 = arith.constant 0 : index
    %3 = vector.load %arg3[%c0_3, %c0_4] : memref<1x128xf32, #tpu.memory_space<vmem>>, vector<1x128xf32>
    %4 = vector.broadcast %3 : vector<1x128xf32> to vector<1024x128xf32>
    %5 = arith.addf %2, %4 : vector<1024x128xf32>
    %cst_5 = arith.constant 0.000000e+00 : f32
    %6 = vector.broadcast %cst_5 : f32 to vector<1024x128xf32>
    %7 = arith.maximumf %5, %6 : vector<1024x128xf32>
    %8 = arith.truncf %7 : vector<1024x128xf32> to vector<1024x128xbf16>
    %c0_6 = arith.constant 0 : index
    %c0_7 = arith.constant 0 : index
    %9 = vector.load %arg4[%c0_6, %c0_7] : memref<128x128xbf16, #tpu.memory_space<vmem>>, vector<128x128xbf16>
    %cst_8 = arith.constant dense<0.000000e+00> : vector<1024x128xf32>
    %10 = tpu.matmul %8, %9, %cst_8 {dimension_numbers = #tpu.dot_dimension_numbers<[1], [0], [0], [1], [0, 0, 1, 1], [], []>} : vector<1024x128xbf16>, vector<128x128xbf16>, vector<1024x128xf32> -> vector<1024x128xf32>
    %c0_9 = arith.constant 0 : index
    %c0_10 = arith.constant 0 : index
    %11 = vector.load %arg5[%c0_9, %c0_10] : memref<1x128xf32, #tpu.memory_space<vmem>>, vector<1x128xf32>
    %12 = vector.broadcast %11 : vector<1x128xf32> to vector<1024x128xf32>
    %13 = arith.addf %10, %12 : vector<1024x128xf32>
    %c0_11 = arith.constant 0 : index
    %c0_12 = arith.constant 0 : index
    %14 = vector.load %arg6[%c0_11, %c0_12] : memref<1024x128xf32, #tpu.memory_space<vmem>>, vector<1024x128xf32>
    tpu.vector_store %arg6[%c0_11, %c0_12], %13 {strides = array<i32>} : memref<1024x128xf32, #tpu.memory_space<vmem>>, vector<1024x128xf32>,
    return
  }
  func.func @transform_0(%arg0: i32) -> (i32, i32) {
    %c0_i32 = arith.constant 0 : i32
    %c0_i32_0 = arith.constant 0 : i32
    return %arg0, %c0_i32 : i32, i32
  }
  func.func @transform_1(%arg0: i32) -> (i32, i32) {
    %c0_i32 = arith.constant 0 : i32
    %c0_i32_0 = arith.constant 0 : i32
    %c0_i32_1 = arith.constant 0 : i32
    return %c0_i32, %c0_i32_0 : i32, i32
  }
  func.func @transform_2(%arg0: i32) -> (i32, i32) {
    %c0_i32 = arith.constant 0 : i32
    %c0_i32_0 = arith.constant 0 : i32
    %c0_i32_1 = arith.constant 0 : i32
    return %c0_i32, %c0_i32_0 : i32, i32
  }
  func.func @transform_3(%arg0: i32) -> (i32, i32) {
    %c0_i32 = arith.constant 0 : i32
    %c0_i32_0 = arith.constant 0 : i32
    %c0_i32_1 = arith.constant 0 : i32
    return %c0_i32, %c0_i32_0 : i32, i32
  }
  func.func @transform_4(%arg0: i32) -> (i32, i32) {
    %c0_i32 = arith.constant 0 : i32
    %c0_i32_0 = arith.constant 0 : i32
    %c0_i32_1 = arith.constant 0 : i32
    return %c0_i32, %c0_i32_0 : i32, i32
  }
  func.func @transform_5(%arg0: i32) -> (i32, i32) {
    %c0_i32 = arith.constant 0 : i32
    %c0_i32_0 = arith.constant 0 : i32
    return %arg0, %c0_i32 : i32, i32
  }
}

</mosaic_0001>

<llo_original>
// kernel: tpu_custom_call.1
$region0: #{tpu_custom_call.1}
  #allocation0 [shape = 'u32[]', space=smem, size = 0x4, offset = 0x4, fixed_abs, tag = 'smem constant byte address 0x4 - core index']
  #allocation1 [shape = 'u32[72,128]{1,0:T(1,128)}', space=vmem, size = 0x9000, scoped, tag = 'internal scratch']
  %s0 = inlined_call_operand.vmem [shape: bf16[2048,64], index: 0, kind: input, shape index: {}]
  %s1 = inlined_call_operand.vmem [shape: bf16[64,128], index: 1, kind: input, shape index: {}]
  %s2 = inlined_call_operand.vmem [shape: f32[1,128], index: 2, kind: input, shape index: {}]
  %s3 = inlined_call_operand.vmem [shape: bf16[128,128], index: 3, kind: input, shape index: {}]
  %s4 = inlined_call_operand.vmem [shape: f32[1,128], index: 4, kind: input, shape index: {}]
  %s5 = inlined_call_operand.hbm [shape: f32[2048,128], index: 5, kind: output, shape index: {}]
  %s6 = sld [smem:[#allocation0]]
  $region53: #{tpu_custom_call.1} parent=0
    _
  %s8 = ssub.s32 1, %s6
  %s9 = scalar_select 0, %s8, %s6
  $region1: #{tpu_custom_call.1} parent=0
    #allocation2 [shape = 'u8[1048576]{0}', space=vmem, size = 0x100000, scoped, tag = 'output window, operand 0']
    #allocation3 [shape = 's32[2]{0}', space=sflag, size = 0x8, scoped, tag = 'scoped memory for tpu_custom_call.1']
    %10 = vsyncpa [#allocation3], 0
    %s11 = scalar_lea.sflag [#allocation3], 1
    %12 = vsyncpa %s11, 0
    loop: start=0, step=1, limit=4
    $region2: #{tpu_custom_call.1} parent=1 // loop_pre_header
      _
    $region3: #{tpu_custom_call.1} parent=1 // loop_header
      %s14 = sphi 0, %s18
      %p15 = scmp.ge.s32.totalorder %s14, 4
      %s24 = sphi 0, %s26
      %s27 = sphi 0, %s24
      %s28 = sphi 0, %s27
      %s44 = sphi 0, %s28
      %s48 = sphi 0, %s48
      %s50 = sphi 0, %s48
      %s51 = sphi 0, %s50
      %s65 = sphi 0, %s51
      %s69 = sphi 0, %s69
      %s71 = sphi 0, %s69
      %s72 = sphi 0, %s71
      %s86 = sphi 0, %s72
      %s90 = sphi 0, %s90
      %s92 = sphi 0, %s90
      %s93 = sphi 0, %s92
      %s107 = sphi 0, %s93
      %s111 = sphi 0, %s111
      %s113 = sphi 0, %s111
      %s114 = sphi 0, %s113
      %s128 = sphi 0, %s114
      %s134 = sphi 0, %s136
      %s137 = sphi 0, %s134
      %s138 = sphi 0, %s137
      %s154 = sphi 0, %s138
    $region4: #{tpu_custom_call.1} parent=1 // loop_header_branch
      %17 = sbr.rel (%p15) target = $region8
    $region5: #{tpu_custom_call.1} parent=1 // loop_body
      %s19 = ssub.s32 %s14, 1
      %s20 = ssub.s32 %s14, 2
      %s21 = sadd.s32 %s14, 1
      %s22 = ssub.s32 %s14, %s21
      %p23 = scmp.eq.s32.totalorder %s22, 0
      %s25 = sadd.s32 %s24, 1
      %s26 = scalar_select %p23, %s24, %s25
      %p29 = pneg %p23
      %p30 = scmp.eq.s32.totalorder %s14, 1
      %p31 = por %p29, %p30
      %p32 = scmp.ne.s32.totalorder %s24, %s27
      %p33 = scmp.eq.s32.totalorder %s14, 0
      %p34 = por %p32, %p33
      %p35 = scmp.ne.s32.totalorder %s24, %s27
      %p36 = scmp.eq.s32.totalorder %s19, 1
      %p37 = por %p35, %p36
      %p38 = scmp.ne.s32.totalorder %s27, %s28
      %p39 = scmp.eq.s32.totalorder %s19, 0
      %p40 = por %p38, %p39
      %p41 = scmp.ne.s32.totalorder %s27, %s28
      %p42 = scmp.eq.s32.totalorder %s20, 1
      %p43 = por %p41, %p42
      %p45 = scmp.ne.s32.totalorder %s28, %s44
      %p46 = scmp.eq.s32.totalorder %s20, 0
      %p47 = por %p45, %p46
      %s49 = sadd.s32 %s48, 1
      %p52 = scmp.eq.s32.totalorder %s14, 1
      %p53 = scmp.ne.s32.totalorder %s48, %s50
      %p54 = scmp.eq.s32.totalorder %s14, 0
      %p55 = por %p53, %p54
      %p56 = scmp.ne.s32.totalorder %s48, %s50
      %p57 = scmp.eq.s32.totalorder %s19, 1
      %p58 = por %p56, %p57
      %p59 = scmp.ne.s32.totalorder %s50, %s51
      %p60 = scmp.eq.s32.totalorder %s19, 0
      %p61 = por %p59, %p60
      %p62 = scmp.ne.s32.totalorder %s50, %s51
      %p63 = scmp.eq.s32.totalorder %s20, 1
      %p64 = por %p62, %p63
      %p66 = scmp.ne.s32.totalorder %s51, %s65
      %p67 = scmp.eq.s32.totalorder %s20, 0
      %p68 = por %p66, %p67
      %s70 = sadd.s32 %s69, 1
      %p73 = scmp.eq.s32.totalorder %s14, 1
      %p74 = scmp.ne.s32.totalorder %s69, %s71
      %p75 = scmp.eq.s32.totalorder %s14, 0
      %p76 = por %p74, %p75
      %p77 = scmp.ne.s32.totalorder %s69, %s71
      %p78 = scmp.eq.s32.totalorder %s19, 1
      %p79 = por %p77, %p78
      %p80 = scmp.ne.s32.totalorder %s71, %s72
      %p81 = scmp.eq.s32.totalorder %s19, 0
      %p82 = por %p80, %p81
      %p83 = scmp.ne.s32.totalorder %s71, %s72
      %p84 = scmp.eq.s32.totalorder %s20, 1
      %p85 = por %p83, %p84
      %p87 = scmp.ne.s32.totalorder %s72, %s86
      %p88 = scmp.eq.s32.totalorder %s20, 0
      %p89 = por %p87, %p88
      %s91 = sadd.s32 %s90, 1
      %p94 = scmp.eq.s32.totalorder %s14, 1
      %p95 = scmp.ne.s32.totalorder %s90, %s92
      %p96 = scmp.eq.s32.totalorder %s14, 0
      %p97 = por %p95, %p96
      %p98 = scmp.ne.s32.totalorder %s90, %s92
      %p99 = scmp.eq.s32.totalorder %s19, 1
      %p100 = por %p98, %p99
      %p101 = scmp.ne.s32.totalorder %s92, %s93
      %p102 = scmp.eq.s32.totalorder %s19, 0
      %p103 = por %p101, %p102
      %p104 = scmp.ne.s32.totalorder %s92, %s93
      %p105 = scmp.eq.s32.totalorder %s20, 1
      %p106 = por %p104, %p105
      %p108 = scmp.ne.s32.totalorder %s93, %s107
      %p109 = scmp.eq.s32.totalorder %s20, 0
      %p110 = por %p108, %p109
      %s112 = sadd.s32 %s111, 1
      %p115 = scmp.eq.s32.totalorder %s14, 1
      %p116 = scmp.ne.s32.totalorder %s111, %s113
      %p117 = scmp.eq.s32.totalorder %s14, 0
      %p118 = por %p116, %p117
      %p119 = scmp.ne.s32.totalorder %s111, %s113
      %p120 = scmp.eq.s32.totalorder %s19, 1
      %p121 = por %p119, %p120
      %p122 = scmp.ne.s32.totalorder %s113, %s114
      %p123 = scmp.eq.s32.totalorder %s19, 0
      %p124 = por %p122, %p123
      %p125 = scmp.ne.s32.totalorder %s113, %s114
      %p126 = scmp.eq.s32.totalorder %s20, 1
      %p127 = por %p125, %p126
      %p129 = scmp.ne.s32.totalorder %s114, %s128
      %p130 = scmp.eq.s32.totalorder %s20, 0
      %p131 = por %p129, %p130
      %s132 = ssub.s32 %s14, %s21
      %p133 = scmp.eq.s32.totalorder %s132, 0
      %s135 = sadd.s32 %s134, 1
      %s136 = scalar_select %p133, %s134, %s135
      %p139 = pneg %p133
      %p140 = scmp.eq.s32.totalorder %s14, 1
      %p141 = por %p139, %p140
      %p142 = scmp.ne.s32.totalorder %s134, %s137
      %p143 = scmp.eq.s32.totalorder %s14, 0
      %p144 = por %p142, %p143
      %p145 = scmp.ne.s32.totalorder %s134, %s137
      %p146 = scmp.eq.s32.totalorder %s19, 1
      %p147 = por %p145, %p146
      %p148 = scmp.ne.s32.totalorder %s137, %s138
      %p149 = scmp.eq.s32.totalorder %s19, 0
      %p150 = por %p148, %p149
      %p151 = scmp.ne.s32.totalorder %s137, %s138
      %p152 = scmp.eq.s32.totalorder %s20, 1
      %p153 = por %p151, %p152
      %p155 = scmp.ne.s32.totalorder %s138, %s154
      %p156 = scmp.eq.s32.totalorder %s20, 0
      %p157 = por %p155, %p156
      %p158 = scmp.le.s32.totalorder 1, %s14
      %p159 = scmp.lt.s32.totalorder %s14, 3
      %p160 = pnand %p158, %p159
      %p161 = pneg %p160
      // Predicated region
      $region9: #{tpu_custom_call.1} parent=5 // pred_check
        _
      $region10: #{tpu_custom_call.1} parent=5 // pred_check_branch
        %163 = sbr.rel (%p160) target = $region12
      $region11: #{tpu_custom_call.1} parent=5 // pred_region
        %s164 = ssub.s32 %s14, 1
        // Predicated region
        $region13: #{tpu_custom_call.1} parent=11 // pred_check
          %p165 = pneg %p61
        $region14: #{tpu_custom_call.1} parent=11 // pred_check_branch
          %167 = sbr.rel (%p165) target = $region16
        $region15: #{tpu_custom_call.1} parent=11 // pred_region
          _
        $region16: #{tpu_custom_call.1} parent=11 // pred_fallthru
          _
        // Predicated region
        $region17: #{tpu_custom_call.1} parent=11 // pred_check
          %p168 = pneg %p82
        $region18: #{tpu_custom_call.1} parent=11 // pred_check_branch
          %170 = sbr.rel (%p168) target = $region20
        $region19: #{tpu_custom_call.1} parent=11 // pred_region
          _
        $region20: #{tpu_custom_call.1} parent=11 // pred_fallthru
          _
        // Predicated region
        $region21: #{tpu_custom_call.1} parent=11 // pred_check
          %p171 = pneg %p103
        $region22: #{tpu_custom_call.1} parent=11 // pred_check_branch
          %173 = sbr.rel (%p171) target = $region24
        $region23: #{tpu_custom_call.1} parent=11 // pred_region
          _
        $region24: #{tpu_custom_call.1} parent=11 // pred_fallthru
          _
        // Predicated region
        $region25: #{tpu_custom_call.1} parent=11 // pred_check
          %p174 = pneg %p124
        $region26: #{tpu_custom_call.1} parent=11 // pred_check_branch
          %176 = sbr.rel (%p174) target = $region28
        $region27: #{tpu_custom_call.1} parent=11 // pred_region
          _
        $region28: #{tpu_custom_call.1} parent=11 // pred_fallthru
          _
      $region12: #{tpu_custom_call.1} parent=5 // pred_fallthru
        _
      %p177 = scmp.lt.s32.totalorder %s14, 2
      // Predicated region
      $region29: #{tpu_custom_call.1} parent=5 // pred_check
        %p178 = pneg %p177
      $region30: #{tpu_custom_call.1} parent=5 // pred_check_branch
        %180 = sbr.rel (%p178) target = $region32
      $region31: #{tpu_custom_call.1} parent=5 // pred_region
        // Predicated region
        $region33: #{tpu_custom_call.1} parent=31 // pred_check
          %p181 = pneg %p34
        $region34: #{tpu_custom_call.1} parent=31 // pred_check_branch
          %183 = sbr.rel (%p181) target = $region36
        $region35: #{tpu_custom_call.1} parent=31 // pred_region
          %s184 = smul.u32 128, %s14
          %p185 = scmp.lt.s32.totalorder %s184, 255
          %s186 = scalar_select %p185, %s184, 255
          %s187 = smul.addr %s186, 4
          %s188 = scalar_lea.vmem %s0, %s187
          %s189 = smul.u32 128, %s14
        $region36: #{tpu_custom_call.1} parent=31 // pred_fallthru
          _
      $region32: #{tpu_custom_call.1} parent=5 // pred_fallthru
        _
      %p190 = scmp.le.s32.totalorder 1, %s14
      %p191 = scmp.lt.s32.totalorder %s14, 3
      %p192 = pnand %p190, %p191
      %p193 = pneg %p192
      // Predicated region
      $region37: #{tpu_custom_call.1} parent=5 // pred_check
        _
      $region38: #{tpu_custom_call.1} parent=5 // pred_check_branch
        %195 = sbr.rel (%p192) target = $region40
      $region39: #{tpu_custom_call.1} parent=5 // pred_region
        %s196 = ssub.s32 %s14, 1
        %s197 = smul.u32 128, %s19
        %p198 = scmp.lt.s32.totalorder %s197, 255
        %s199 = scalar_select %p198, %s197, 255
        %s200 = smul.addr %s199, 4
        %s201 = scalar_lea.vmem %s0, %s200
        %p202 = pneg %p40
        %p203 = pneg %p37
        %p204 = pneg %p61
        %p205 = pneg %p58
        %p206 = pneg %p82
        %p207 = pneg %p79
        %p208 = pneg %p103
        %p209 = pneg %p100
        %p210 = pneg %p124
        %p211 = pneg %p121
        %p212 = pneg %p150
        %p213 = pneg %p147
        %s214 = sand.u32 %s137, 1
        %s215 = scalar_lea.sflag [#allocation3], %s214
        %s216 = sand.u32 %s137, 1
        %s217 = smul.addr %s216, 1024
        %s218 = scalar_lea.vmem [#allocation2], %s217
        %s219 = smul.u32 128, %s19
        %p220 = scmp.lt.s32.totalorder %s219, 255
        %s221 = scalar_select %p220, %s219, 255
        %s222 = smul.addr %s221, 4
        %s223 = scalar_lea.vmem %s0, %s222
        %s224 = smul.u32 128, %s19
        %s225 = smul.u32 128, %s19
        %v227 = vld [vmem:[%s223] sm:$0xf]
        %v228 = vld [vmem:[%s223 + $0x4] sm:$0xf]
        %v229 = vld [vmem:[%s223 + $0x8] sm:$0xf]
        %v230 = vld [vmem:[%s223 + $0xc] sm:$0xf]
        %v231 = vld [vmem:[%s223 + $0x10] sm:$0xf]
        %v232 = vld [vmem:[%s223 + $0x14] sm:$0xf]
        %v233 = vld [vmem:[%s223 + $0x18] sm:$0xf]
        %v234 = vld [vmem:[%s223 + $0x1c] sm:$0xf]
        %v235 = vld [vmem:[%s223 + $0x20] sm:$0xf]
        %v236 = vld [vmem:[%s223 + $0x24] sm:$0xf]
        %v237 = vld [vmem:[%s223 + $0x28] sm:$0xf]
        %v238 = vld [vmem:[%s223 + $0x2c] sm:$0xf]
        %v239 = vld [vmem:[%s223 + $0x30] sm:$0xf]
        %v240 = vld [vmem:[%s223 + $0x34] sm:$0xf]
        %v241 = vld [vmem:[%s223 + $0x38] sm:$0xf]
        %v242 = vld [vmem:[%s223 + $0x3c] sm:$0xf]
        %v243 = vld [vmem:[%s223 + $0x40] sm:$0xf]
        %v244 = vld [vmem:[%s223 + $0x44] sm:$0xf]
        %v245 = vld [vmem:[%s223 + $0x48] sm:$0xf]
        %v246 = vld [vmem:[%s223 + $0x4c] sm:$0xf]
        %v247 = vld [vmem:[%s223 + $0x50] sm:$0xf]
        %v248 = vld [vmem:[%s223 + $0x54] sm:$0xf]
        %v249 = vld [vmem:[%s223 + $0x58] sm:$0xf]
        %v250 = vld [vmem:[%s223 + $0x5c] sm:$0xf]
        %v251 = vld [vmem:[%s223 + $0x60] sm:$0xf]
        %v252 = vld [vmem:[%s223 + $0x64] sm:$0xf]
        %v253 = vld [vmem:[%s223 + $0x68] sm:$0xf]
        %v254 = vld [vmem:[%s223 + $0x6c] sm:$0xf]
        %v255 = vld [vmem:[%s223 + $0x70] sm:$0xf]
        %v256 = vld [vmem:[%s223 + $0x74] sm:$0xf]
        %v257 = vld [vmem:[%s223 + $0x78] sm:$0xf]
        %v258 = vld [vmem:[%s223 + $0x7c] sm:$0xf]
        %v259 = vld [vmem:[%s223 + $0x80] sm:$0xf]
        %v260 = vld [vmem:[%s223 + $0x84] sm:$0xf]
        %v261 = vld [vmem:[%s223 + $0x88] sm:$0xf]
        %v262 = vld [vmem:[%s223 + $0x8c] sm:$0xf]
        %v263 = vld [vmem:[%s223 + $0x90] sm:$0xf]
        %v264 = vld [vmem:[%s223 + $0x94] sm:$0xf]
        %v265 = vld [vmem:[%s223 + $0x98] sm:$0xf]
        %v266 = vld [vmem:[%s223 + $0x9c] sm:$0xf]
        %v267 = vld [vmem:[%s223 + $0xa0] sm:$0xf]
        %v268 = vld [vmem:[%s223 + $0xa4] sm:$0xf]
        %v269 = vld [vmem:[%s223 + $0xa8] sm:$0xf]
        %v270 = vld [vmem:[%s223 + $0xac] sm:$0xf]
        %v271 = vld [vmem:[%s223 + $0xb0] sm:$0xf]
        %v272 = vld [vmem:[%s223 + $0xb4] sm:$0xf]
        %v273 = vld [vmem:[%s223 + $0xb8] sm:$0xf]
        %v274 = vld [vmem:[%s223 + $0xbc] sm:$0xf]
        %v275 = vld [vmem:[%s223 + $0xc0] sm:$0xf]
        %v276 = vld [vmem:[%s223 + $0xc4] sm:$0xf]
        %v277 = vld [vmem:[%s223 + $0xc8] sm:$0xf]
        %v278 = vld [vmem:[%s223 + $0xcc] sm:$0xf]
        %v279 = vld [vmem:[%s223 + $0xd0] sm:$0xf]
        %v280 = vld [vmem:[%s223 + $0xd4] sm:$0xf]
        %v281 = vld [vmem:[%s223 + $0xd8] sm:$0xf]
        %v282 = vld [vmem:[%s223 + $0xdc] sm:$0xf]
        %v283 = vld [vmem:[%s223 + $0xe0] sm:$0xf]
        %v284 = vld [vmem:[%s223 + $0xe4] sm:$0xf]
        %v285 = vld [vmem:[%s223 + $0xe8] sm:$0xf]
        %v286 = vld [vmem:[%s223 + $0xec] sm:$0xf]
        %v287 = vld [vmem:[%s223 + $0xf0] sm:$0xf]
        %v288 = vld [vmem:[%s223 + $0xf4] sm:$0xf]
        %v289 = vld [vmem:[%s223 + $0xf8] sm:$0xf]
        %v290 = vld [vmem:[%s223 + $0xfc] sm:$0xf]
        %v291 = vld [vmem:[%s223 + $0x100] sm:$0xf]
        %v292 = vld [vmem:[%s223 + $0x104] sm:$0xf]
        %v293 = vld [vmem:[%s223 + $0x108] sm:$0xf]
        %v294 = vld [vmem:[%s223 + $0x10c] sm:$0xf]
        %v295 = vld [vmem:[%s223 + $0x110] sm:$0xf]
        %v296 = vld [vmem:[%s223 + $0x114] sm:$0xf]
        %v297 = vld [vmem:[%s223 + $0x118] sm:$0xf]
        %v298 = vld [vmem:[%s223 + $0x11c] sm:$0xf]
        %v299 = vld [vmem:[%s223 + $0x120] sm:$0xf]
        %v300 = vld [vmem:[%s223 + $0x124] sm:$0xf]
        %v301 = vld [vmem:[%s223 + $0x128] sm:$0xf]
        %v302 = vld [vmem:[%s223 + $0x12c] sm:$0xf]
        %v303 = vld [vmem:[%s223 + $0x130] sm:$0xf]
        %v304 = vld [vmem:[%s223 + $0x134] sm:$0xf]
        %v305 = vld [vmem:[%s223 + $0x138] sm:$0xf]
        %v306 = vld [vmem:[%s223 + $0x13c] sm:$0xf]
        %v307 = vld [vmem:[%s223 + $0x140] sm:$0xf]
        %v308 = vld [vmem:[%s223 + $0x144] sm:$0xf]
        %v309 = vld [vmem:[%s223 + $0x148] sm:$0xf]
        %v310 = vld [vmem:[%s223 + $0x14c] sm:$0xf]
        %v311 = vld [vmem:[%s223 + $0x150] sm:$0xf]
        %v312 = vld [vmem:[%s223 + $0x154] sm:$0xf]
        %v313 = vld [vmem:[%s223 + $0x158] sm:$0xf]
        %v314 = vld [vmem:[%s223 + $0x15c] sm:$0xf]
        %v315 = vld [vmem:[%s223 + $0x160] sm:$0xf]
        %v316 = vld [vmem:[%s223 + $0x164] sm:$0xf]
        %v317 = vld [vmem:[%s223 + $0x168] sm:$0xf]
        %v318 = vld [vmem:[%s223 + $0x16c] sm:$0xf]
        %v319 = vld [vmem:[%s223 + $0x170] sm:$0xf]
        %v320 = vld [vmem:[%s223 + $0x174] sm:$0xf]
        %v321 = vld [vmem:[%s223 + $0x178] sm:$0xf]
        %v322 = vld [vmem:[%s223 + $0x17c] sm:$0xf]
        %v323 = vld [vmem:[%s223 + $0x180] sm:$0xf]
        %v324 = vld [vmem:[%s223 + $0x184] sm:$0xf]
        %v325 = vld [vmem:[%s223 + $0x188] sm:$0xf]
        %v326 = vld [vmem:[%s223 + $0x18c] sm:$0xf]
        %v327 = vld [vmem:[%s223 + $0x190] sm:$0xf]
        %v328 = vld [vmem:[%s223 + $0x194] sm:$0xf]
        %v329 = vld [vmem:[%s223 + $0x198] sm:$0xf]
        %v330 = vld [vmem:[%s223 + $0x19c] sm:$0xf]
        %v331 = vld [vmem:[%s223 + $0x1a0] sm:$0xf]
        %v332 = vld [vmem:[%s223 + $0x1a4] sm:$0xf]
        %v333 = vld [vmem:[%s223 + $0x1a8] sm:$0xf]
        %v334 = vld [vmem:[%s223 + $0x1ac] sm:$0xf]
        %v335 = vld [vmem:[%s223 + $0x1b0] sm:$0xf]
        %v336 = vld [vmem:[%s223 + $0x1b4] sm:$0xf]
        %v337 = vld [vmem:[%s223 + $0x1b8] sm:$0xf]
        %v338 = vld [vmem:[%s223 + $0x1bc] sm:$0xf]
        %v339 = vld [vmem:[%s223 + $0x1c0] sm:$0xf]
        %v340 = vld [vmem:[%s223 + $0x1c4] sm:$0xf]
        %v341 = vld [vmem:[%s223 + $0x1c8] sm:$0xf]
        %v342 = vld [vmem:[%s223 + $0x1cc] sm:$0xf]
        %v343 = vld [vmem:[%s223 + $0x1d0] sm:$0xf]
        %v344 = vld [vmem:[%s223 + $0x1d4] sm:$0xf]
        %v345 = vld [vmem:[%s223 + $0x1d8] sm:$0xf]
        %v346 = vld [vmem:[%s223 + $0x1dc] sm:$0xf]
        %v347 = vld [vmem:[%s223 + $0x1e0] sm:$0xf]
        %v348 = vld [vmem:[%s223 + $0x1e4] sm:$0xf]
        %v349 = vld [vmem:[%s223 + $0x1e8] sm:$0xf]
        %v350 = vld [vmem:[%s223 + $0x1ec] sm:$0xf]
        %v351 = vld [vmem:[%s223 + $0x1f0] sm:$0xf]
        %v352 = vld [vmem:[%s223 + $0x1f4] sm:$0xf]
        %v353 = vld [vmem:[%s223 + $0x1f8] sm:$0xf]
        %v354 = vld [vmem:[%s223 + $0x1fc] sm:$0xf]
        %v355 = vld [vmem:[%s1] sm:$0xf]
        %v356 = vld [vmem:[%s1 + $0x4] sm:$0xf]
        %v357 = vld [vmem:[%s1 + $0x8] sm:$0xf]
        %v358 = vld [vmem:[%s1 + $0xc] sm:$0xf]
        %v359 = vld [vmem:[%s1 + $0x10] sm:$0xf]
        %v360 = vld [vmem:[%s1 + $0x14] sm:$0xf]
        %v361 = vld [vmem:[%s1 + $0x18] sm:$0xf]
        %v362 = vld [vmem:[%s1 + $0x1c] sm:$0xf]
        %v363 = vld [vmem:[%s2] sm:$0x1]
        %v365 = vperm.slane %v363, 0
        %v495 = vunpack.c.l.b16 %v227
        %v496 = vunpack.c.l.b16 %v228
        %v497 = vunpack.c.l.b16 %v229
        %v498 = vunpack.c.l.b16 %v230
        %v499 = vunpack.c.l.b16 %v231
        %v500 = vunpack.c.l.b16 %v232
        %v501 = vunpack.c.l.b16 %v233
        %v502 = vunpack.c.l.b16 %v234
        %v503 = vunpack.c.l.b16 %v235
        %v504 = vunpack.c.l.b16 %v236
        %v505 = vunpack.c.l.b16 %v237
        %v506 = vunpack.c.l.b16 %v238
        %v507 = vunpack.c.l.b16 %v239
        %v508 = vunpack.c.l.b16 %v240
        %v509 = vunpack.c.l.b16 %v241
        %v510 = vunpack.c.l.b16 %v242
        %v511 = vunpack.c.l.b16 %v243
        %v512 = vunpack.c.l.b16 %v244
        %v513 = vunpack.c.l.b16 %v245
        %v514 = vunpack.c.l.b16 %v246
        %v515 = vunpack.c.l.b16 %v247
        %v516 = vunpack.c.l.b16 %v248
        %v517 = vunpack.c.l.b16 %v249
        %v518 = vunpack.c.l.b16 %v250
        %v519 = vunpack.c.l.b16 %v251
        %v520 = vunpack.c.l.b16 %v252
        %v521 = vunpack.c.l.b16 %v253
        %v522 = vunpack.c.l.b16 %v254
        %v523 = vunpack.c.l.b16 %v255
        %v524 = vunpack.c.l.b16 %v256
        %v525 = vunpack.c.l.b16 %v257
        %v526 = vunpack.c.l.b16 %v258
        %v527 = vunpack.c.l.b16 %v259
        %v528 = vunpack.c.l.b16 %v260
        %v529 = vunpack.c.l.b16 %v261
        %v530 = vunpack.c.l.b16 %v262
        %v531 = vunpack.c.l.b16 %v263
        %v532 = vunpack.c.l.b16 %v264
        %v533 = vunpack.c.l.b16 %v265
        %v534 = vunpack.c.l.b16 %v266
        %v535 = vunpack.c.l.b16 %v267
        %v536 = vunpack.c.l.b16 %v268
        %v537 = vunpack.c.l.b16 %v269
        %v538 = vunpack.c.l.b16 %v270
        %v539 = vunpack.c.l.b16 %v271
        %v540 = vunpack.c.l.b16 %v272
        %v541 = vunpack.c.l.b16 %v273
        %v542 = vunpack.c.l.b16 %v274
        %v543 = vunpack.c.l.b16 %v275
        %v544 = vunpack.c.l.b16 %v276
        %v545 = vunpack.c.l.b16 %v277
        %v546 = vunpack.c.l.b16 %v278
        %v547 = vunpack.c.l.b16 %v279
        %v548 = vunpack.c.l.b16 %v280
        %v549 = vunpack.c.l.b16 %v281
        %v550 = vunpack.c.l.b16 %v282
        %v551 = vunpack.c.l.b16 %v283
        %v552 = vunpack.c.l.b16 %v284
        %v553 = vunpack.c.l.b16 %v285
        %v554 = vunpack.c.l.b16 %v286
        %v555 = vunpack.c.l.b16 %v287
        %v556 = vunpack.c.l.b16 %v288
        %v557 = vunpack.c.l.b16 %v289
        %v558 = vunpack.c.l.b16 %v290
        %v559 = vunpack.c.l.b16 %v291
        %v560 = vunpack.c.l.b16 %v292
        %v561 = vunpack.c.l.b16 %v293
        %v562 = vunpack.c.l.b16 %v294
        %v563 = vunpack.c.l.b16 %v295
        %v564 = vunpack.c.l.b16 %v296
        %v565 = vunpack.c.l.b16 %v297
        %v566 = vunpack.c.l.b16 %v298
        %v567 = vunpack.c.l.b16 %v299
        %v568 = vunpack.c.l.b16 %v300
        %v569 = vunpack.c.l.b16 %v301
        %v570 = vunpack.c.l.b16 %v302
        %v571 = vunpack.c.l.b16 %v303
        %v572 = vunpack.c.l.b16 %v304
        %v573 = vunpack.c.l.b16 %v305
        %v574 = vunpack.c.l.b16 %v306
        %v575 = vunpack.c.l.b16 %v307
        %v576 = vunpack.c.l.b16 %v308
        %v577 = vunpack.c.l.b16 %v309
        %v578 = vunpack.c.l.b16 %v310
        %v579 = vunpack.c.l.b16 %v311
        %v580 = vunpack.c.l.b16 %v312
        %v581 = vunpack.c.l.b16 %v313
        %v582 = vunpack.c.l.b16 %v314
        %v583 = vunpack.c.l.b16 %v315
        %v584 = vunpack.c.l.b16 %v316
        %v585 = vunpack.c.l.b16 %v317
        %v586 = vunpack.c.l.b16 %v318
        %v587 = vunpack.c.l.b16 %v319
        %v588 = vunpack.c.l.b16 %v320
        %v589 = vunpack.c.l.b16 %v321
        %v590 = vunpack.c.l.b16 %v322
        %v591 = vunpack.c.l.b16 %v323
        %v592 = vunpack.c.l.b16 %v324
        %v593 = vunpack.c.l.b16 %v325
        %v594 = vunpack.c.l.b16 %v326
        %v595 = vunpack.c.l.b16 %v327
        %v596 = vunpack.c.l.b16 %v328
        %v597 = vunpack.c.l.b16 %v329
        %v598 = vunpack.c.l.b16 %v330
        %v599 = vunpack.c.l.b16 %v331
        %v600 = vunpack.c.l.b16 %v332
        %v601 = vunpack.c.l.b16 %v333
        %v602 = vunpack.c.l.b16 %v334
        %v603 = vunpack.c.l.b16 %v335
        %v604 = vunpack.c.l.b16 %v336
        %v605 = vunpack.c.l.b16 %v337
        %v606 = vunpack.c.l.b16 %v338
        %v607 = vunpack.c.l.b16 %v339
        %v608 = vunpack.c.l.b16 %v340
        %v609 = vunpack.c.l.b16 %v341
        %v610 = vunpack.c.l.b16 %v342
        %v611 = vunpack.c.l.b16 %v343
        %v612 = vunpack.c.l.b16 %v344
        %v613 = vunpack.c.l.b16 %v345
        %v614 = vunpack.c.l.b16 %v346
        %v615 = vunpack.c.l.b16 %v347
        %v616 = vunpack.c.l.b16 %v348
        %v617 = vunpack.c.l.b16 %v349
        %v618 = vunpack.c.l.b16 %v350
        %v619 = vunpack.c.l.b16 %v351
        %v620 = vunpack.c.l.b16 %v352
        %v621 = vunpack.c.l.b16 %v353
        %v622 = vunpack.c.l.b16 %v354
        %v623 = vpack.c.b16 %v496, %v495
        %v624 = vpack.c.b16 %v498, %v497
        %v625 = vpack.c.b16 %v500, %v499
        %v626 = vpack.c.b16 %v502, %v501
        %v627 = vpack.c.b16 %v504, %v503
        %v628 = vpack.c.b16 %v506, %v505
        %v629 = vpack.c.b16 %v508, %v507
        %v630 = vpack.c.b16 %v510, %v509
        %v631 = vpack.c.b16 %v512, %v511
        %v632 = vpack.c.b16 %v514, %v513
        %v633 = vpack.c.b16 %v516, %v515
        %v634 = vpack.c.b16 %v518, %v517
        %v635 = vpack.c.b16 %v520, %v519
        %v636 = vpack.c.b16 %v522, %v521
        %v637 = vpack.c.b16 %v524, %v523
        %v638 = vpack.c.b16 %v526, %v525
        %v639 = vpack.c.b16 %v528, %v527
        %v640 = vpack.c.b16 %v530, %v529
        %v641 = vpack.c.b16 %v532, %v531
        %v642 = vpack.c.b16 %v534, %v533
        %v643 = vpack.c.b16 %v536, %v535
        %v644 = vpack.c.b16 %v538, %v537
        %v645 = vpack.c.b16 %v540, %v539
        %v646 = vpack.c.b16 %v542, %v541
        %v647 = vpack.c.b16 %v544, %v543
        %v648 = vpack.c.b16 %v546, %v545
        %v649 = vpack.c.b16 %v548, %v547
        %v650 = vpack.c.b16 %v550, %v549
        %v651 = vpack.c.b16 %v552, %v551
        %v652 = vpack.c.b16 %v554, %v553
        %v653 = vpack.c.b16 %v556, %v555
        %v654 = vpack.c.b16 %v558, %v557
        %v655 = vpack.c.b16 %v560, %v559
        %v656 = vpack.c.b16 %v562, %v561
        %v657 = vpack.c.b16 %v564, %v563
        %v658 = vpack.c.b16 %v566, %v565
        %v659 = vpack.c.b16 %v568, %v567
        %v660 = vpack.c.b16 %v570, %v569
        %v661 = vpack.c.b16 %v572, %v571
        %v662 = vpack.c.b16 %v574, %v573
        %v663 = vpack.c.b16 %v576, %v575
        %v664 = vpack.c.b16 %v578, %v577
        %v665 = vpack.c.b16 %v580, %v579
        %v666 = vpack.c.b16 %v582, %v581
        %v667 = vpack.c.b16 %v584, %v583
        %v668 = vpack.c.b16 %v586, %v585
        %v669 = vpack.c.b16 %v588, %v587
        %v670 = vpack.c.b16 %v590, %v589
        %v671 = vpack.c.b16 %v592, %v591
        %v672 = vpack.c.b16 %v594, %v593
        %v673 = vpack.c.b16 %v596, %v595
        %v674 = vpack.c.b16 %v598, %v597
        %v675 = vpack.c.b16 %v600, %v599
        %v676 = vpack.c.b16 %v602, %v601
        %v677 = vpack.c.b16 %v604, %v603
        %v678 = vpack.c.b16 %v606, %v605
        %v679 = vpack.c.b16 %v608, %v607
        %v680 = vpack.c.b16 %v610, %v609
        %v681 = vpack.c.b16 %v612, %v611
        %v682 = vpack.c.b16 %v614, %v613
        %v683 = vpack.c.b16 %v616, %v615
        %v684 = vpack.c.b16 %v618, %v617
        %v685 = vpack.c.b16 %v620, %v619
        %v686 = vpack.c.b16 %v622, %v621
        %v695 = vunpack.c.l.b16 %v355
        %v696 = vunpack.c.l.b16 %v356
        %v697 = vunpack.c.l.b16 %v357
        %v698 = vunpack.c.l.b16 %v358
        %v699 = vunpack.c.l.b16 %v359
        %v700 = vunpack.c.l.b16 %v360
        %v701 = vunpack.c.l.b16 %v361
        %v702 = vunpack.c.l.b16 %v362
        %v703 = vpack.c.b16 %v696, %v695
        %v704 = vpack.c.b16 %v698, %v697
        %v705 = vpack.c.b16 %v700, %v699
        %v706 = vpack.c.b16 %v702, %v701
        %vm711 = vcmask 523264
        %v713 = vsel %vm711, %v623, 0
        %v716 = vsel %vm711, %v624, 0
        %v719 = vsel %vm711, %v625, 0
        %v722 = vsel %vm711, %v626, 0
        %v725 = vsel %vm711, %v627, 0
        %v728 = vsel %vm711, %v628, 0
        %v731 = vsel %vm711, %v629, 0
        %v734 = vsel %vm711, %v630, 0
        %v737 = vsel %vm711, %v631, 0
        %v740 = vsel %vm711, %v632, 0
        %v743 = vsel %vm711, %v633, 0
        %v746 = vsel %vm711, %v634, 0
        %v749 = vsel %vm711, %v635, 0
        %v752 = vsel %vm711, %v636, 0
        %v755 = vsel %vm711, %v637, 0
        %v758 = vsel %vm711, %v638, 0
        %v761 = vsel %vm711, %v639, 0
        %v764 = vsel %vm711, %v640, 0
        %v767 = vsel %vm711, %v641, 0
        %v770 = vsel %vm711, %v642, 0
        %v773 = vsel %vm711, %v643, 0
        %v776 = vsel %vm711, %v644, 0
        %v779 = vsel %vm711, %v645, 0
        %v782 = vsel %vm711, %v646, 0
        %v785 = vsel %vm711, %v647, 0
        %v788 = vsel %vm711, %v648, 0
        %v791 = vsel %vm711, %v649, 0
        %v794 = vsel %vm711, %v650, 0
        %v797 = vsel %vm711, %v651, 0
        %v800 = vsel %vm711, %v652, 0
        %v803 = vsel %vm711, %v653, 0
        %v806 = vsel %vm711, %v654, 0
        %v809 = vsel %vm711, %v655, 0
        %v812 = vsel %vm711, %v656, 0
        %v815 = vsel %vm711, %v657, 0
        %v818 = vsel %vm711, %v658, 0
        %v821 = vsel %vm711, %v659, 0
        %v824 = vsel %vm711, %v660, 0
        %v827 = vsel %vm711, %v661, 0
        %v830 = vsel %vm711, %v662, 0
        %v833 = vsel %vm711, %v663, 0
        %v836 = vsel %vm711, %v664, 0
        %v839 = vsel %vm711, %v665, 0
        %v842 = vsel %vm711, %v666, 0
        %v845 = vsel %vm711, %v667, 0
        %v848 = vsel %vm711, %v668, 0
        %v851 = vsel %vm711, %v669, 0
        %v854 = vsel %vm711, %v670, 0
        %v857 = vsel %vm711, %v671, 0
        %v860 = vsel %vm711, %v672, 0
        %v863 = vsel %vm711, %v673, 0
        %v866 = vsel %vm711, %v674, 0
        %v869 = vsel %vm711, %v675, 0
        %v872 = vsel %vm711, %v676, 0
        %v875 = vsel %vm711, %v677, 0
        %v878 = vsel %vm711, %v678, 0
        %v881 = vsel %vm711, %v679, 0
        %v884 = vsel %vm711, %v680, 0
        %v887 = vsel %vm711, %v681, 0
        %v890 = vsel %vm711, %v682, 0
        %v893 = vsel %vm711, %v683, 0
        %v896 = vsel %vm711, %v684, 0
        %v899 = vsel %vm711, %v685, 0
        %v902 = vsel %vm711, %v686, 0
        %904 = vmatpush.bf16.msra.mxu0 0
        %905 = vmatpush.bf16.msra.mxu0 0
        %906 = vmatpush.bf16.msra.mxu0 0
        %907 = vmatpush.bf16.msra.mxu0 0
        %908 = vmatpush.bf16.msra.mxu0 %v706
        %909 = vmatpush.bf16.msra.mxu0 %v705
        %910 = vmatpush.bf16.msra.mxu0 %v704
        %911 = vmatpush.bf16.msra.mxu0 %v703
        %912 = vmatmul.bf16.gmra.mxu0 %v713
        %v913 = vpop.f32.mrf.mxu0
        %v914 = vadd.f32 %v365, %v913
        %v915 = vpop.f32.mrf.mxu0
        %v916 = vadd.f32 %v365, %v915
        %917 = vmatmul.bf16.gmra.mxu0 %v716
        %v918 = vpop.f32.mrf.mxu0
        %v919 = vadd.f32 %v365, %v918
        %v920 = vpop.f32.mrf.mxu0
        %v921 = vadd.f32 %v365, %v920
        %922 = vmatmul.bf16.gmra.mxu0 %v719
        %v923 = vpop.f32.mrf.mxu0
        %v924 = vadd.f32 %v365, %v923
        %v925 = vpop.f32.mrf.mxu0
        %v926 = vadd.f32 %v365, %v925
        %927 = vmatmul.bf16.gmra.mxu0 %v722
        %v928 = vpop.f32.mrf.mxu0
        %v929 = vadd.f32 %v365, %v928
        %v930 = vpop.f32.mrf.mxu0
        %v931 = vadd.f32 %v365, %v930
        %932 = vmatmul.bf16.gmra.mxu0 %v725
        %v933 = vpop.f32.mrf.mxu0
        %v934 = vadd.f32 %v365, %v933
        %v935 = vpop.f32.mrf.mxu0
        %v936 = vadd.f32 %v365, %v935
        %937 = vmatmul.bf16.gmra.mxu0 %v728
        %v938 = vpop.f32.mrf.mxu0
        %v939 = vadd.f32 %v365, %v938
        %v940 = vpop.f32.mrf.mxu0
        %v941 = vadd.f32 %v365, %v940
        %942 = vmatmul.bf16.gmra.mxu0 %v731
        %v943 = vpop.f32.mrf.mxu0
        %v944 = vadd.f32 %v365, %v943
        %v945 = vpop.f32.mrf.mxu0
        %v946 = vadd.f32 %v365, %v945
        %947 = vmatmul.bf16.gmra.mxu0 %v734
        %v948 = vpop.f32.mrf.mxu0
        %v949 = vadd.f32 %v365, %v948
        %v950 = vpop.f32.mrf.mxu0
        %v951 = vadd.f32 %v365, %v950
        %952 = vmatmul.bf16.gmra.mxu0 %v737
        %v953 = vpop.f32.mrf.mxu0
        %v954 = vadd.f32 %v365, %v953
        %v955 = vpop.f32.mrf.mxu0
        %v956 = vadd.f32 %v365, %v955
        %957 = vmatmul.bf16.gmra.mxu0 %v740
        %v958 = vpop.f32.mrf.mxu0
        %v959 = vadd.f32 %v365, %v958
        %v960 = vpop.f32.mrf.mxu0
        %v961 = vadd.f32 %v365, %v960
        %962 = vmatmul.bf16.gmra.mxu0 %v743
        %v963 = vpop.f32.mrf.mxu0
        %v964 = vadd.f32 %v365, %v963
        %v965 = vpop.f32.mrf.mxu0
        %v966 = vadd.f32 %v365, %v965
        %967 = vmatmul.bf16.gmra.mxu0 %v746
        %v968 = vpop.f32.mrf.mxu0
        %v969 = vadd.f32 %v365, %v968
        %v970 = vpop.f32.mrf.mxu0
        %v971 = vadd.f32 %v365, %v970
        %972 = vmatmul.bf16.gmra.mxu0 %v749
        %v973 = vpop.f32.mrf.mxu0
        %v974 = vadd.f32 %v365, %v973
        %v975 = vpop.f32.mrf.mxu0
        %v976 = vadd.f32 %v365, %v975
        %977 = vmatmul.bf16.gmra.mxu0 %v752
        %v978 = vpop.f32.mrf.mxu0
        %v979 = vadd.f32 %v365, %v978
        %v980 = vpop.f32.mrf.mxu0
        %v981 = vadd.f32 %v365, %v980
        %982 = vmatmul.bf16.gmra.mxu0 %v755
        %v983 = vpop.f32.mrf.mxu0
        %v984 = vadd.f32 %v365, %v983
        %v985 = vpop.f32.mrf.mxu0
        %v986 = vadd.f32 %v365, %v985
        %987 = vmatmul.bf16.gmra.mxu0 %v758
        %v988 = vpop.f32.mrf.mxu0
        %v989 = vadd.f32 %v365, %v988
        %v990 = vpop.f32.mrf.mxu0
        %v991 = vadd.f32 %v365, %v990
        %992 = vmatmul.bf16.gmra.mxu0 %v761
        %v993 = vpop.f32.mrf.mxu0
        %v994 = vadd.f32 %v365, %v993
        %v995 = vpop.f32.mrf.mxu0
        %v996 = vadd.f32 %v365, %v995
        %997 = vmatmul.bf16.gmra.mxu0 %v764
        %v998 = vpop.f32.mrf.mxu0
        %v999 = vadd.f32 %v365, %v998
        %v1000 = vpop.f32.mrf.mxu0
        %v1001 = vadd.f32 %v365, %v1000
        %1002 = vmatmul.bf16.gmra.mxu0 %v767
        %v1003 = vpop.f32.mrf.mxu0
        %v1004 = vadd.f32 %v365, %v1003
        %v1005 = vpop.f32.mrf.mxu0
        %v1006 = vadd.f32 %v365, %v1005
        %1007 = vmatmul.bf16.gmra.mxu0 %v770
        %v1008 = vpop.f32.mrf.mxu0
        %v1009 = vadd.f32 %v365, %v1008
        %v1010 = vpop.f32.mrf.mxu0
        %v1011 = vadd.f32 %v365, %v1010
        %1012 = vmatmul.bf16.gmra.mxu0 %v773
        %v1013 = vpop.f32.mrf.mxu0
        %v1014 = vadd.f32 %v365, %v1013
        %v1015 = vpop.f32.mrf.mxu0
        %v1016 = vadd.f32 %v365, %v1015
        %1017 = vmatmul.bf16.gmra.mxu0 %v776
        %v1018 = vpop.f32.mrf.mxu0
        %v1019 = vadd.f32 %v365, %v1018
        %v1020 = vpop.f32.mrf.mxu0
        %v1021 = vadd.f32 %v365, %v1020
        %1022 = vmatmul.bf16.gmra.mxu0 %v779
        %v1023 = vpop.f32.mrf.mxu0
        %v1024 = vadd.f32 %v365, %v1023
        %v1025 = vpop.f32.mrf.mxu0
        %v1026 = vadd.f32 %v365, %v1025
        %1027 = vmatmul.bf16.gmra.mxu0 %v782
        %v1028 = vpop.f32.mrf.mxu0
        %v1029 = vadd.f32 %v365, %v1028
        %v1030 = vpop.f32.mrf.mxu0
        %v1031 = vadd.f32 %v365, %v1030
        %1032 = vmatmul.bf16.gmra.mxu0 %v785
        %v1033 = vpop.f32.mrf.mxu0
        %v1034 = vadd.f32 %v365, %v1033
        %v1035 = vpop.f32.mrf.mxu0
        %v1036 = vadd.f32 %v365, %v1035
        %1037 = vmatmul.bf16.gmra.mxu0 %v788
        %v1038 = vpop.f32.mrf.mxu0
        %v1039 = vadd.f32 %v365, %v1038
        %v1040 = vpop.f32.mrf.mxu0
        %v1041 = vadd.f32 %v365, %v1040
        %1042 = vmatmul.bf16.gmra.mxu0 %v791
        %v1043 = vpop.f32.mrf.mxu0
        %v1044 = vadd.f32 %v365, %v1043
        %v1045 = vpop.f32.mrf.mxu0
        %v1046 = vadd.f32 %v365, %v1045
        %1047 = vmatmul.bf16.gmra.mxu0 %v794
        %v1048 = vpop.f32.mrf.mxu0
        %v1049 = vadd.f32 %v365, %v1048
        %v1050 = vpop.f32.mrf.mxu0
        %v1051 = vadd.f32 %v365, %v1050
        %1052 = vmatmul.bf16.gmra.mxu0 %v797
        %v1053 = vpop.f32.mrf.mxu0
        %v1054 = vadd.f32 %v365, %v1053
        %v1055 = vpop.f32.mrf.mxu0
        %v1056 = vadd.f32 %v365, %v1055
        %1057 = vmatmul.bf16.gmra.mxu0 %v800
        %v1058 = vpop.f32.mrf.mxu0
        %v1059 = vadd.f32 %v365, %v1058
        %v1060 = vpop.f32.mrf.mxu0
        %v1061 = vadd.f32 %v365, %v1060
        %1062 = vmatmul.bf16.gmra.mxu0 %v803
        %v1063 = vpop.f32.mrf.mxu0
        %v1064 = vadd.f32 %v365, %v1063
        %v1065 = vpop.f32.mrf.mxu0
        %v1066 = vadd.f32 %v365, %v1065
        %1067 = vmatmul.bf16.gmra.mxu0 %v806
        %v1068 = vpop.f32.mrf.mxu0
        %v1069 = vadd.f32 %v365, %v1068
        %v1070 = vpop.f32.mrf.mxu0
        %v1071 = vadd.f32 %v365, %v1070
        %1072 = vmatmul.bf16.gmra.mxu0 %v809
        %v1073 = vpop.f32.mrf.mxu0
        %v1074 = vadd.f32 %v365, %v1073
        %v1075 = vpop.f32.mrf.mxu0
        %v1076 = vadd.f32 %v365, %v1075
        %1077 = vmatmul.bf16.gmra.mxu0 %v812
        %v1078 = vpop.f32.mrf.mxu0
        %v1079 = vadd.f32 %v365, %v1078
        %v1080 = vpop.f32.mrf.mxu0
        %v1081 = vadd.f32 %v365, %v1080
        %1082 = vmatmul.bf16.gmra.mxu0 %v815
        %v1083 = vpop.f32.mrf.mxu0
        %v1084 = vadd.f32 %v365, %v1083
        %v1085 = vpop.f32.mrf.mxu0
        %v1086 = vadd.f32 %v365, %v1085
        %1087 = vmatmul.bf16.gmra.mxu0 %v818
        %v1088 = vpop.f32.mrf.mxu0
        %v1089 = vadd.f32 %v365, %v1088
        %v1090 = vpop.f32.mrf.mxu0
        %v1091 = vadd.f32 %v365, %v1090
        %1092 = vmatmul.bf16.gmra.mxu0 %v821
        %v1093 = vpop.f32.mrf.mxu0
        %v1094 = vadd.f32 %v365, %v1093
        %v1095 = vpop.f32.mrf.mxu0
        %v1096 = vadd.f32 %v365, %v1095
        %1097 = vmatmul.bf16.gmra.mxu0 %v824
        %v1098 = vpop.f32.mrf.mxu0
        %v1099 = vadd.f32 %v365, %v1098
        %v1100 = vpop.f32.mrf.mxu0
        %v1101 = vadd.f32 %v365, %v1100
        %1102 = vmatmul.bf16.gmra.mxu0 %v827
        %v1103 = vpop.f32.mrf.mxu0
        %v1104 = vadd.f32 %v365, %v1103
        %v1105 = vpop.f32.mrf.mxu0
        %v1106 = vadd.f32 %v365, %v1105
        %1107 = vmatmul.bf16.gmra.mxu0 %v830
        %v1108 = vpop.f32.mrf.mxu0
        %v1109 = vadd.f32 %v365, %v1108
        %v1110 = vpop.f32.mrf.mxu0
        %v1111 = vadd.f32 %v365, %v1110
        %1112 = vmatmul.bf16.gmra.mxu0 %v833
        %v1113 = vpop.f32.mrf.mxu0
        %v1114 = vadd.f32 %v365, %v1113
        %v1115 = vpop.f32.mrf.mxu0
        %v1116 = vadd.f32 %v365, %v1115
        %1117 = vmatmul.bf16.gmra.mxu0 %v836
        %v1118 = vpop.f32.mrf.mxu0
        %v1119 = vadd.f32 %v365, %v1118
        %v1120 = vpop.f32.mrf.mxu0
        %v1121 = vadd.f32 %v365, %v1120
        %1122 = vmatmul.bf16.gmra.mxu0 %v839
        %v1123 = vpop.f32.mrf.mxu0
        %v1124 = vadd.f32 %v365, %v1123
        %v1125 = vpop.f32.mrf.mxu0
        %v1126 = vadd.f32 %v365, %v1125
        %1127 = vmatmul.bf16.gmra.mxu0 %v842
        %v1128 = vpop.f32.mrf.mxu0
        %v1129 = vadd.f32 %v365, %v1128
        %v1130 = vpop.f32.mrf.mxu0
        %v1131 = vadd.f32 %v365, %v1130
        %1132 = vmatmul.bf16.gmra.mxu0 %v845
        %v1133 = vpop.f32.mrf.mxu0
        %v1134 = vadd.f32 %v365, %v1133
        %v1135 = vpop.f32.mrf.mxu0
        %v1136 = vadd.f32 %v365, %v1135
        %1137 = vmatmul.bf16.gmra.mxu0 %v848
        %v1138 = vpop.f32.mrf.mxu0
        %v1139 = vadd.f32 %v365, %v1138
        %v1140 = vpop.f32.mrf.mxu0
        %v1141 = vadd.f32 %v365, %v1140
        %1142 = vmatmul.bf16.gmra.mxu0 %v851
        %v1143 = vpop.f32.mrf.mxu0
        %v1144 = vadd.f32 %v365, %v1143
        %v1145 = vpop.f32.mrf.mxu0
        %v1146 = vadd.f32 %v365, %v1145
        %1147 = vmatmul.bf16.gmra.mxu0 %v854
        %v1148 = vpop.f32.mrf.mxu0
        %v1149 = vadd.f32 %v365, %v1148
        %v1150 = vpop.f32.mrf.mxu0
        %v1151 = vadd.f32 %v365, %v1150
        %1152 = vmatmul.bf16.gmra.mxu0 %v857
        %v1153 = vpop.f32.mrf.mxu0
        %v1154 = vadd.f32 %v365, %v1153
        %v1155 = vpop.f32.mrf.mxu0
        %v1156 = vadd.f32 %v365, %v1155
        %1157 = vmatmul.bf16.gmra.mxu0 %v860
        %v1158 = vpop.f32.mrf.mxu0
        %v1159 = vadd.f32 %v365, %v1158
        %v1160 = vpop.f32.mrf.mxu0
        %v1161 = vadd.f32 %v365, %v1160
        %1162 = vmatmul.bf16.gmra.mxu0 %v863
        %v1163 = vpop.f32.mrf.mxu0
        %v1164 = vadd.f32 %v365, %v1163
        %v1165 = vpop.f32.mrf.mxu0
        %v1166 = vadd.f32 %v365, %v1165
        %1167 = vmatmul.bf16.gmra.mxu0 %v866
        %v1168 = vpop.f32.mrf.mxu0
        %v1169 = vadd.f32 %v365, %v1168
        %v1170 = vpop.f32.mrf.mxu0
        %v1171 = vadd.f32 %v365, %v1170
        %1172 = vmatmul.bf16.gmra.mxu0 %v869
        %v1173 = vpop.f32.mrf.mxu0
        %v1174 = vadd.f32 %v365, %v1173
        %v1175 = vpop.f32.mrf.mxu0
        %v1176 = vadd.f32 %v365, %v1175
        %1177 = vmatmul.bf16.gmra.mxu0 %v872
        %v1178 = vpop.f32.mrf.mxu0
        %v1179 = vadd.f32 %v365, %v1178
        %v1180 = vpop.f32.mrf.mxu0
        %v1181 = vadd.f32 %v365, %v1180
        %1182 = vmatmul.bf16.gmra.mxu0 %v875
        %v1183 = vpop.f32.mrf.mxu0
        %v1184 = vadd.f32 %v365, %v1183
        %v1185 = vpop.f32.mrf.mxu0
        %v1186 = vadd.f32 %v365, %v1185
        %1187 = vmatmul.bf16.gmra.mxu0 %v878
        %v1188 = vpop.f32.mrf.mxu0
        %v1189 = vadd.f32 %v365, %v1188
        %v1190 = vpop.f32.mrf.mxu0
        %v1191 = vadd.f32 %v365, %v1190
        %1192 = vmatmul.bf16.gmra.mxu0 %v881
        %v1193 = vpop.f32.mrf.mxu0
        %v1194 = vadd.f32 %v365, %v1193
        %v1195 = vpop.f32.mrf.mxu0
        %v1196 = vadd.f32 %v365, %v1195
        %1197 = vmatmul.bf16.gmra.mxu0 %v884
        %v1198 = vpop.f32.mrf.mxu0
        %v1199 = vadd.f32 %v365, %v1198
        %v1200 = vpop.f32.mrf.mxu0
        %v1201 = vadd.f32 %v365, %v1200
        %1202 = vmatmul.bf16.gmra.mxu0 %v887
        %v1203 = vpop.f32.mrf.mxu0
        %v1204 = vadd.f32 %v365, %v1203
        %v1205 = vpop.f32.mrf.mxu0
        %v1206 = vadd.f32 %v365, %v1205
        %1207 = vmatmul.bf16.gmra.mxu0 %v890
        %v1208 = vpop.f32.mrf.mxu0
        %v1209 = vadd.f32 %v365, %v1208
        %v1210 = vpop.f32.mrf.mxu0
        %v1211 = vadd.f32 %v365, %v1210
        %1212 = vmatmul.bf16.gmra.mxu0 %v893
        %v1213 = vpop.f32.mrf.mxu0
        %v1214 = vadd.f32 %v365, %v1213
        %v1215 = vpop.f32.mrf.mxu0
        %v1216 = vadd.f32 %v365, %v1215
        %1217 = vmatmul.bf16.gmra.mxu0 %v896
        %v1218 = vpop.f32.mrf.mxu0
        %v1219 = vadd.f32 %v365, %v1218
        %v1220 = vpop.f32.mrf.mxu0
        %v1221 = vadd.f32 %v365, %v1220
        %1222 = vmatmul.bf16.gmra.mxu0 %v899
        %v1223 = vpop.f32.mrf.mxu0
        %v1224 = vadd.f32 %v365, %v1223
        %v1225 = vpop.f32.mrf.mxu0
        %v1226 = vadd.f32 %v365, %v1225
        %1227 = vmatmul.bf16.gmra.mxu0 %v902
        %v1228 = vpop.f32.mrf.mxu0
        %v1229 = vadd.f32 %v365, %v1228
        %v1230 = vpop.f32.mrf.mxu0
        %v1231 = vadd.f32 %v365, %v1230
        %1232 = vdwg.mxu0
        %v1233 = vmax.f32 %v914, 0.0
        %v1234 = vmax.f32 %v916, 0.0
        %v1235 = vmax.f32 %v919, 0.0
        %v1236 = vmax.f32 %v921, 0.0
        %v1237 = vmax.f32 %v924, 0.0
        %v1238 = vmax.f32 %v926, 0.0
        %v1239 = vmax.f32 %v929, 0.0
        %v1240 = vmax.f32 %v931, 0.0
        %v1241 = vmax.f32 %v934, 0.0
        %v1242 = vmax.f32 %v936, 0.0
        %v1243 = vmax.f32 %v939, 0.0
        %v1244 = vmax.f32 %v941, 0.0
        %v1245 = vmax.f32 %v944, 0.0
        %v1246 = vmax.f32 %v946, 0.0
        %v1247 = vmax.f32 %v949, 0.0
        %v1248 = vmax.f32 %v951, 0.0
        %v1249 = vmax.f32 %v954, 0.0
        %v1250 = vmax.f32 %v956, 0.0
        %v1251 = vmax.f32 %v959, 0.0
        %v1252 = vmax.f32 %v961, 0.0
        %v1253 = vmax.f32 %v964, 0.0
        %v1254 = vmax.f32 %v966, 0.0
        %v1255 = vmax.f32 %v969, 0.0
        %v1256 = vmax.f32 %v971, 0.0
        %v1257 = vmax.f32 %v974, 0.0
        %v1258 = vmax.f32 %v976, 0.0
        %v1259 = vmax.f32 %v979, 0.0
        %v1260 = vmax.f32 %v981, 0.0
        %v1261 = vmax.f32 %v984, 0.0
        %v1262 = vmax.f32 %v986, 0.0
        %v1263 = vmax.f32 %v989, 0.0
        %v1264 = vmax.f32 %v991, 0.0
        %v1265 = vmax.f32 %v994, 0.0
        %v1266 = vmax.f32 %v996, 0.0
        %v1267 = vmax.f32 %v999, 0.0
        %v1268 = vmax.f32 %v1001, 0.0
        %v1269 = vmax.f32 %v1004, 0.0
        %v1270 = vmax.f32 %v1006, 0.0
        %v1271 = vmax.f32 %v1009, 0.0
        %v1272 = vmax.f32 %v1011, 0.0
        %v1273 = vmax.f32 %v1014, 0.0
        %v1274 = vmax.f32 %v1016, 0.0
        %v1275 = vmax.f32 %v1019, 0.0
        %v1276 = vmax.f32 %v1021, 0.0
        %v1277 = vmax.f32 %v1024, 0.0
        %v1278 = vmax.f32 %v1026, 0.0
        %v1279 = vmax.f32 %v1029, 0.0
        %v1280 = vmax.f32 %v1031, 0.0
        %v1281 = vmax.f32 %v1034, 0.0
        %v1282 = vmax.f32 %v1036, 0.0
        %v1283 = vmax.f32 %v1039, 0.0
        %v1284 = vmax.f32 %v1041, 0.0
        %v1285 = vmax.f32 %v1044, 0.0
        %v1286 = vmax.f32 %v1046, 0.0
        %v1287 = vmax.f32 %v1049, 0.0
        %v1288 = vmax.f32 %v1051, 0.0
        %v1289 = vmax.f32 %v1054, 0.0
        %v1290 = vmax.f32 %v1056, 0.0
        %v1291 = vmax.f32 %v1059, 0.0
        %v1292 = vmax.f32 %v1061, 0.0
        %v1293 = vmax.f32 %v1064, 0.0
        %v1294 = vmax.f32 %v1066, 0.0
        %v1295 = vmax.f32 %v1069, 0.0
        %v1296 = vmax.f32 %v1071, 0.0
        %v1297 = vmax.f32 %v1074, 0.0
        %v1298 = vmax.f32 %v1076, 0.0
        %v1299 = vmax.f32 %v1079, 0.0
        %v1300 = vmax.f32 %v1081, 0.0
        %v1301 = vmax.f32 %v1084, 0.0
        %v1302 = vmax.f32 %v1086, 0.0
        %v1303 = vmax.f32 %v1089, 0.0
        %v1304 = vmax.f32 %v1091, 0.0
        %v1305 = vmax.f32 %v1094, 0.0
        %v1306 = vmax.f32 %v1096, 0.0
        %v1307 = vmax.f32 %v1099, 0.0
        %v1308 = vmax.f32 %v1101, 0.0
        %v1309 = vmax.f32 %v1104, 0.0
        %v1310 = vmax.f32 %v1106, 0.0
        %v1311 = vmax.f32 %v1109, 0.0
        %v1312 = vmax.f32 %v1111, 0.0
        %v1313 = vmax.f32 %v1114, 0.0
        %v1314 = vmax.f32 %v1116, 0.0
        %v1315 = vmax.f32 %v1119, 0.0
        %v1316 = vmax.f32 %v1121, 0.0
        %v1317 = vmax.f32 %v1124, 0.0
        %v1318 = vmax.f32 %v1126, 0.0
        %v1319 = vmax.f32 %v1129, 0.0
        %v1320 = vmax.f32 %v1131, 0.0
        %v1321 = vmax.f32 %v1134, 0.0
        %v1322 = vmax.f32 %v1136, 0.0
        %v1323 = vmax.f32 %v1139, 0.0
        %v1324 = vmax.f32 %v1141, 0.0
        %v1325 = vmax.f32 %v1144, 0.0
        %v1326 = vmax.f32 %v1146, 0.0
        %v1327 = vmax.f32 %v1149, 0.0
        %v1328 = vmax.f32 %v1151, 0.0
        %v1329 = vmax.f32 %v1154, 0.0
        %v1330 = vmax.f32 %v1156, 0.0
        %v1331 = vmax.f32 %v1159, 0.0
        %v1332 = vmax.f32 %v1161, 0.0
        %v1333 = vmax.f32 %v1164, 0.0
        %v1334 = vmax.f32 %v1166, 0.0
        %v1335 = vmax.f32 %v1169, 0.0
        %v1336 = vmax.f32 %v1171, 0.0
        %v1337 = vmax.f32 %v1174, 0.0
        %v1338 = vmax.f32 %v1176, 0.0
        %v1339 = vmax.f32 %v1179, 0.0
        %v1340 = vmax.f32 %v1181, 0.0
        %v1341 = vmax.f32 %v1184, 0.0
        %v1342 = vmax.f32 %v1186, 0.0
        %v1343 = vmax.f32 %v1189, 0.0
        %v1344 = vmax.f32 %v1191, 0.0
        %v1345 = vmax.f32 %v1194, 0.0
        %v1346 = vmax.f32 %v1196, 0.0
        %v1347 = vmax.f32 %v1199, 0.0
        %v1348 = vmax.f32 %v1201, 0.0
        %v1349 = vmax.f32 %v1204, 0.0
        %v1350 = vmax.f32 %v1206, 0.0
        %v1351 = vmax.f32 %v1209, 0.0
        %v1352 = vmax.f32 %v1211, 0.0
        %v1353 = vmax.f32 %v1214, 0.0
        %v1354 = vmax.f32 %v1216, 0.0
        %v1355 = vmax.f32 %v1219, 0.0
        %v1356 = vmax.f32 %v1221, 0.0
        %v1357 = vmax.f32 %v1224, 0.0
        %v1358 = vmax.f32 %v1226, 0.0
        %v1359 = vmax.f32 %v1229, 0.0
        %v1360 = vmax.f32 %v1231, 0.0
        %v1361 = vpack.c.bf16 %v1234, %v1233
        %v1362 = vpack.c.bf16 %v1236, %v1235
        %v1363 = vpack.c.bf16 %v1238, %v1237
        %v1364 = vpack.c.bf16 %v1240, %v1239
        %v1365 = vpack.c.bf16 %v1242, %v1241
        %v1366 = vpack.c.bf16 %v1244, %v1243
        %v1367 = vpack.c.bf16 %v1246, %v1245
        %v1368 = vpack.c.bf16 %v1248, %v1247
        %v1369 = vpack.c.bf16 %v1250, %v1249
        %v1370 = vpack.c.bf16 %v1252, %v1251
        %v1371 = vpack.c.bf16 %v1254, %v1253
        %v1372 = vpack.c.bf16 %v1256, %v1255
        %v1373 = vpack.c.bf16 %v1258, %v1257
        %v1374 = vpack.c.bf16 %v1260, %v1259
        %v1375 = vpack.c.bf16 %v1262, %v1261
        %v1376 = vpack.c.bf16 %v1264, %v1263
        %v1377 = vpack.c.bf16 %v1266, %v1265
        %v1378 = vpack.c.bf16 %v1268, %v1267
        %v1379 = vpack.c.bf16 %v1270, %v1269
        %v1380 = vpack.c.bf16 %v1272, %v1271
        %v1381 = vpack.c.bf16 %v1274, %v1273
        %v1382 = vpack.c.bf16 %v1276, %v1275
        %v1383 = vpack.c.bf16 %v1278, %v1277
        %v1384 = vpack.c.bf16 %v1280, %v1279
        %v1385 = vpack.c.bf16 %v1282, %v1281
        %v1386 = vpack.c.bf16 %v1284, %v1283
        %v1387 = vpack.c.bf16 %v1286, %v1285
        %v1388 = vpack.c.bf16 %v1288, %v1287
        %v1389 = vpack.c.bf16 %v1290, %v1289
        %v1390 = vpack.c.bf16 %v1292, %v1291
        %v1391 = vpack.c.bf16 %v1294, %v1293
        %v1392 = vpack.c.bf16 %v1296, %v1295
        %v1393 = vpack.c.bf16 %v1298, %v1297
        %v1394 = vpack.c.bf16 %v1300, %v1299
        %v1395 = vpack.c.bf16 %v1302, %v1301
        %v1396 = vpack.c.bf16 %v1304, %v1303
        %v1397 = vpack.c.bf16 %v1306, %v1305
        %v1398 = vpack.c.bf16 %v1308, %v1307
        %v1399 = vpack.c.bf16 %v1310, %v1309
        %v1400 = vpack.c.bf16 %v1312, %v1311
        %v1401 = vpack.c.bf16 %v1314, %v1313
        %v1402 = vpack.c.bf16 %v1316, %v1315
        %v1403 = vpack.c.bf16 %v1318, %v1317
        %v1404 = vpack.c.bf16 %v1320, %v1319
        %v1405 = vpack.c.bf16 %v1322, %v1321
        %v1406 = vpack.c.bf16 %v1324, %v1323
        %v1407 = vpack.c.bf16 %v1326, %v1325
        %v1408 = vpack.c.bf16 %v1328, %v1327
        %v1409 = vpack.c.bf16 %v1330, %v1329
        %v1410 = vpack.c.bf16 %v1332, %v1331
        %v1411 = vpack.c.bf16 %v1334, %v1333
        %v1412 = vpack.c.bf16 %v1336, %v1335
        %v1413 = vpack.c.bf16 %v1338, %v1337
        %v1414 = vpack.c.bf16 %v1340, %v1339
        %v1415 = vpack.c.bf16 %v1342, %v1341
        %v1416 = vpack.c.bf16 %v1344, %v1343
        %v1417 = vpack.c.bf16 %v1346, %v1345
        %v1418 = vpack.c.bf16 %v1348, %v1347
        %v1419 = vpack.c.bf16 %v1350, %v1349
        %v1420 = vpack.c.bf16 %v1352, %v1351
        %v1421 = vpack.c.bf16 %v1354, %v1353
        %v1422 = vpack.c.bf16 %v1356, %v1355
        %v1423 = vpack.c.bf16 %v1358, %v1357
        %v1424 = vpack.c.bf16 %v1360, %v1359
        %v1425 = vld [vmem:[%s3] sm:$0xf]
        %v1426 = vld [vmem:[%s3 + $0x4] sm:$0xf]
        %v1427 = vld [vmem:[%s3 + $0x8] sm:$0xf]
        %v1428 = vld [vmem:[%s3 + $0xc] sm:$0xf]
        %v1429 = vld [vmem:[%s3 + $0x10] sm:$0xf]
        %v1430 = vld [vmem:[%s3 + $0x14] sm:$0xf]
        %v1431 = vld [vmem:[%s3 + $0x18] sm:$0xf]
        %v1432 = vld [vmem:[%s3 + $0x1c] sm:$0xf]
        %v1433 = vld [vmem:[%s3 + $0x20] sm:$0xf]
        %v1434 = vld [vmem:[%s3 + $0x24] sm:$0xf]
        %v1435 = vld [vmem:[%s3 + $0x28] sm:$0xf]
        %v1436 = vld [vmem:[%s3 + $0x2c] sm:$0xf]
        %v1437 = vld [vmem:[%s3 + $0x30] sm:$0xf]
        %v1438 = vld [vmem:[%s3 + $0x34] sm:$0xf]
        %v1439 = vld [vmem:[%s3 + $0x38] sm:$0xf]
        %v1440 = vld [vmem:[%s3 + $0x3c] sm:$0xf]
        %v1441 = vld [vmem:[%s4] sm:$0x1]
        %v1443 = vperm.slane %v1441, 0
        %v1461 = vunpack.c.l.b16 %v1425
        %v1462 = vunpack.c.l.b16 %v1426
        %v1463 = vunpack.c.l.b16 %v1427
        %v1464 = vunpack.c.l.b16 %v1428
        %v1465 = vunpack.c.l.b16 %v1429
        %v1466 = vunpack.c.l.b16 %v1430
        %v1467 = vunpack.c.l.b16 %v1431
        %v1468 = vunpack.c.l.b16 %v1432
        %v1469 = vunpack.c.l.b16 %v1433
        %v1470 = vunpack.c.l.b16 %v1434
        %v1471 = vunpack.c.l.b16 %v1435
        %v1472 = vunpack.c.l.b16 %v1436
        %v1473 = vunpack.c.l.b16 %v1437
        %v1474 = vunpack.c.l.b16 %v1438
        %v1475 = vunpack.c.l.b16 %v1439
        %v1476 = vunpack.c.l.b16 %v1440
        %v1477 = vpack.c.b16 %v1462, %v1461
        %v1478 = vpack.c.b16 %v1464, %v1463
        %v1479 = vpack.c.b16 %v1466, %v1465
        %v1480 = vpack.c.b16 %v1468, %v1467
        %v1481 = vpack.c.b16 %v1470, %v1469
        %v1482 = vpack.c.b16 %v1472, %v1471
        %v1483 = vpack.c.b16 %v1474, %v1473
        %v1484 = vpack.c.b16 %v1476, %v1475
        %1493 = vmatpush.bf16.msra.mxu0 %v1484
        %1494 = vmatpush.bf16.msra.mxu0 %v1483
        %1495 = vmatpush.bf16.msra.mxu0 %v1482
        %1496 = vmatpush.bf16.msra.mxu0 %v1481
        %1497 = vmatpush.bf16.msra.mxu0 %v1480
        %1498 = vmatpush.bf16.msra.mxu0 %v1479
        %1499 = vmatpush.bf16.msra.mxu0 %v1478
        %1500 = vmatpush.bf16.msra.mxu0 %v1477
        %1501 = vmatmul.bf16.gmra.mxu0 %v1361
        %v1502 = vpop.f32.mrf.mxu0
        %v1503 = vadd.f32 %v1443, %v1502
        %v1504 = vpop.f32.mrf.mxu0
        %v1505 = vadd.f32 %v1443, %v1504
        %1506 = vmatmul.bf16.gmra.mxu0 %v1362
        %v1507 = vpop.f32.mrf.mxu0
        %v1508 = vadd.f32 %v1443, %v1507
        %v1509 = vpop.f32.mrf.mxu0
        %v1510 = vadd.f32 %v1443, %v1509
        %1511 = vmatmul.bf16.gmra.mxu0 %v1363
        %v1512 = vpop.f32.mrf.mxu0
        %v1513 = vadd.f32 %v1443, %v1512
        %v1514 = vpop.f32.mrf.mxu0
        %v1515 = vadd.f32 %v1443, %v1514
        %1516 = vmatmul.bf16.gmra.mxu0 %v1364
        %v1517 = vpop.f32.mrf.mxu0
        %v1518 = vadd.f32 %v1443, %v1517
        %v1519 = vpop.f32.mrf.mxu0
        %v1520 = vadd.f32 %v1443, %v1519
        %1521 = vmatmul.bf16.gmra.mxu0 %v1365
        %v1522 = vpop.f32.mrf.mxu0
        %v1523 = vadd.f32 %v1443, %v1522
        %v1524 = vpop.f32.mrf.mxu0
        %v1525 = vadd.f32 %v1443, %v1524
        %1526 = vmatmul.bf16.gmra.mxu0 %v1366
        %v1527 = vpop.f32.mrf.mxu0
        %v1528 = vadd.f32 %v1443, %v1527
        %v1529 = vpop.f32.mrf.mxu0
        %v1530 = vadd.f32 %v1443, %v1529
        %1531 = vmatmul.bf16.gmra.mxu0 %v1367
        %v1532 = vpop.f32.mrf.mxu0
        %v1533 = vadd.f32 %v1443, %v1532
        %v1534 = vpop.f32.mrf.mxu0
        %v1535 = vadd.f32 %v1443, %v1534
        %1536 = vmatmul.bf16.gmra.mxu0 %v1368
        %v1537 = vpop.f32.mrf.mxu0
        %v1538 = vadd.f32 %v1443, %v1537
        %v1539 = vpop.f32.mrf.mxu0
        %v1540 = vadd.f32 %v1443, %v1539
        %1541 = vmatmul.bf16.gmra.mxu0 %v1369
        %v1542 = vpop.f32.mrf.mxu0
        %v1543 = vadd.f32 %v1443, %v1542
        %v1544 = vpop.f32.mrf.mxu0
        %v1545 = vadd.f32 %v1443, %v1544
        %1546 = vmatmul.bf16.gmra.mxu0 %v1370
        %v1547 = vpop.f32.mrf.mxu0
        %v1548 = vadd.f32 %v1443, %v1547
        %v1549 = vpop.f32.mrf.mxu0
        %v1550 = vadd.f32 %v1443, %v1549
        %1551 = vmatmul.bf16.gmra.mxu0 %v1371
        %v1552 = vpop.f32.mrf.mxu0
        %v1553 = vadd.f32 %v1443, %v1552
        %v1554 = vpop.f32.mrf.mxu0
        %v1555 = vadd.f32 %v1443, %v1554
        %1556 = vmatmul.bf16.gmra.mxu0 %v1372
        %v1557 = vpop.f32.mrf.mxu0
        %v1558 = vadd.f32 %v1443, %v1557
        %v1559 = vpop.f32.mrf.mxu0
        %v1560 = vadd.f32 %v1443, %v1559
        %1561 = vmatmul.bf16.gmra.mxu0 %v1373
        %v1562 = vpop.f32.mrf.mxu0
        %v1563 = vadd.f32 %v1443, %v1562
        %v1564 = vpop.f32.mrf.mxu0
        %v1565 = vadd.f32 %v1443, %v1564
        %1566 = vmatmul.bf16.gmra.mxu0 %v1374
        %v1567 = vpop.f32.mrf.mxu0
        %v1568 = vadd.f32 %v1443, %v1567
        %v1569 = vpop.f32.mrf.mxu0
        %v1570 = vadd.f32 %v1443, %v1569
        %1571 = vmatmul.bf16.gmra.mxu0 %v1375
        %v1572 = vpop.f32.mrf.mxu0
        %v1573 = vadd.f32 %v1443, %v1572
        %v1574 = vpop.f32.mrf.mxu0
        %v1575 = vadd.f32 %v1443, %v1574
        %1576 = vmatmul.bf16.gmra.mxu0 %v1376
        %v1577 = vpop.f32.mrf.mxu0
        %v1578 = vadd.f32 %v1443, %v1577
        %v1579 = vpop.f32.mrf.mxu0
        %v1580 = vadd.f32 %v1443, %v1579
        %1581 = vmatmul.bf16.gmra.mxu0 %v1377
        %v1582 = vpop.f32.mrf.mxu0
        %v1583 = vadd.f32 %v1443, %v1582
        %v1584 = vpop.f32.mrf.mxu0
        %v1585 = vadd.f32 %v1443, %v1584
        %1586 = vmatmul.bf16.gmra.mxu0 %v1378
        %v1587 = vpop.f32.mrf.mxu0
        %v1588 = vadd.f32 %v1443, %v1587
        %v1589 = vpop.f32.mrf.mxu0
        %v1590 = vadd.f32 %v1443, %v1589
        %1591 = vmatmul.bf16.gmra.mxu0 %v1379
        %v1592 = vpop.f32.mrf.mxu0
        %v1593 = vadd.f32 %v1443, %v1592
        %v1594 = vpop.f32.mrf.mxu0
        %v1595 = vadd.f32 %v1443, %v1594
        %1596 = vmatmul.bf16.gmra.mxu0 %v1380
        %v1597 = vpop.f32.mrf.mxu0
        %v1598 = vadd.f32 %v1443, %v1597
        %v1599 = vpop.f32.mrf.mxu0
        %v1600 = vadd.f32 %v1443, %v1599
        %1601 = vmatmul.bf16.gmra.mxu0 %v1381
        %v1602 = vpop.f32.mrf.mxu0
        %v1603 = vadd.f32 %v1443, %v1602
        %v1604 = vpop.f32.mrf.mxu0
        %v1605 = vadd.f32 %v1443, %v1604
        %1606 = vmatmul.bf16.gmra.mxu0 %v1382
        %v1607 = vpop.f32.mrf.mxu0
        %v1608 = vadd.f32 %v1443, %v1607
        %v1609 = vpop.f32.mrf.mxu0
        %v1610 = vadd.f32 %v1443, %v1609
        %1611 = vmatmul.bf16.gmra.mxu0 %v1383
        %v1612 = vpop.f32.mrf.mxu0
        %v1613 = vadd.f32 %v1443, %v1612
        %v1614 = vpop.f32.mrf.mxu0
        %v1615 = vadd.f32 %v1443, %v1614
        %1616 = vmatmul.bf16.gmra.mxu0 %v1384
        %v1617 = vpop.f32.mrf.mxu0
        %v1618 = vadd.f32 %v1443, %v1617
        %v1619 = vpop.f32.mrf.mxu0
        %v1620 = vadd.f32 %v1443, %v1619
        %1621 = vmatmul.bf16.gmra.mxu0 %v1385
        %v1622 = vpop.f32.mrf.mxu0
        %v1623 = vadd.f32 %v1443, %v1622
        %v1624 = vpop.f32.mrf.mxu0
        %v1625 = vadd.f32 %v1443, %v1624
        %1626 = vmatmul.bf16.gmra.mxu0 %v1386
        %v1627 = vpop.f32.mrf.mxu0
        %v1628 = vadd.f32 %v1443, %v1627
        %v1629 = vpop.f32.mrf.mxu0
        %v1630 = vadd.f32 %v1443, %v1629
        %1631 = vmatmul.bf16.gmra.mxu0 %v1387
        %v1632 = vpop.f32.mrf.mxu0
        %v1633 = vadd.f32 %v1443, %v1632
        %v1634 = vpop.f32.mrf.mxu0
        %v1635 = vadd.f32 %v1443, %v1634
        %1636 = vmatmul.bf16.gmra.mxu0 %v1388
        %v1637 = vpop.f32.mrf.mxu0
        %v1638 = vadd.f32 %v1443, %v1637
        %v1639 = vpop.f32.mrf.mxu0
        %v1640 = vadd.f32 %v1443, %v1639
        %1641 = vmatmul.bf16.gmra.mxu0 %v1389
        %v1642 = vpop.f32.mrf.mxu0
        %v1643 = vadd.f32 %v1443, %v1642
        %v1644 = vpop.f32.mrf.mxu0
        %v1645 = vadd.f32 %v1443, %v1644
        %1646 = vmatmul.bf16.gmra.mxu0 %v1390
        %v1647 = vpop.f32.mrf.mxu0
        %v1648 = vadd.f32 %v1443, %v1647
        %v1649 = vpop.f32.mrf.mxu0
        %v1650 = vadd.f32 %v1443, %v1649
        %1651 = vmatmul.bf16.gmra.mxu0 %v1391
        %v1652 = vpop.f32.mrf.mxu0
        %v1653 = vadd.f32 %v1443, %v1652
        %v1654 = vpop.f32.mrf.mxu0
        %v1655 = vadd.f32 %v1443, %v1654
        %1656 = vmatmul.bf16.gmra.mxu0 %v1392
        %v1657 = vpop.f32.mrf.mxu0
        %v1658 = vadd.f32 %v1443, %v1657
        %v1659 = vpop.f32.mrf.mxu0
        %v1660 = vadd.f32 %v1443, %v1659
        %1661 = vmatmul.bf16.gmra.mxu0 %v1393
        %v1662 = vpop.f32.mrf.mxu0
        %v1663 = vadd.f32 %v1443, %v1662
        %v1664 = vpop.f32.mrf.mxu0
        %v1665 = vadd.f32 %v1443, %v1664
        %1666 = vmatmul.bf16.gmra.mxu0 %v1394
        %v1667 = vpop.f32.mrf.mxu0
        %v1668 = vadd.f32 %v1443, %v1667
        %v1669 = vpop.f32.mrf.mxu0
        %v1670 = vadd.f32 %v1443, %v1669
        %1671 = vmatmul.bf16.gmra.mxu0 %v1395
        %v1672 = vpop.f32.mrf.mxu0
        %v1673 = vadd.f32 %v1443, %v1672
        %v1674 = vpop.f32.mrf.mxu0
        %v1675 = vadd.f32 %v1443, %v1674
        %1676 = vmatmul.bf16.gmra.mxu0 %v1396
        %v1677 = vpop.f32.mrf.mxu0
        %v1678 = vadd.f32 %v1443, %v1677
        %v1679 = vpop.f32.mrf.mxu0
        %v1680 = vadd.f32 %v1443, %v1679
        %1681 = vmatmul.bf16.gmra.mxu0 %v1397
        %v1682 = vpop.f32.mrf.mxu0
        %v1683 = vadd.f32 %v1443, %v1682
        %v1684 = vpop.f32.mrf.mxu0
        %v1685 = vadd.f32 %v1443, %v1684
        %1686 = vmatmul.bf16.gmra.mxu0 %v1398
        %v1687 = vpop.f32.mrf.mxu0
        %v1688 = vadd.f32 %v1443, %v1687
        %v1689 = vpop.f32.mrf.mxu0
        %v1690 = vadd.f32 %v1443, %v1689
        %1691 = vmatmul.bf16.gmra.mxu0 %v1399
        %v1692 = vpop.f32.mrf.mxu0
        %v1693 = vadd.f32 %v1443, %v1692
        %v1694 = vpop.f32.mrf.mxu0
        %v1695 = vadd.f32 %v1443, %v1694
        %1696 = vmatmul.bf16.gmra.mxu0 %v1400
        %v1697 = vpop.f32.mrf.mxu0
        %v1698 = vadd.f32 %v1443, %v1697
        %v1699 = vpop.f32.mrf.mxu0
        %v1700 = vadd.f32 %v1443, %v1699
        %1701 = vmatmul.bf16.gmra.mxu0 %v1401
        %v1702 = vpop.f32.mrf.mxu0
        %v1703 = vadd.f32 %v1443, %v1702
        %v1704 = vpop.f32.mrf.mxu0
        %v1705 = vadd.f32 %v1443, %v1704
        %1706 = vmatmul.bf16.gmra.mxu0 %v1402
        %v1707 = vpop.f32.mrf.mxu0
        %v1708 = vadd.f32 %v1443, %v1707
        %v1709 = vpop.f32.mrf.mxu0
        %v1710 = vadd.f32 %v1443, %v1709
        %1711 = vmatmul.bf16.gmra.mxu0 %v1403
        %v1712 = vpop.f32.mrf.mxu0
        %v1713 = vadd.f32 %v1443, %v1712
        %v1714 = vpop.f32.mrf.mxu0
        %v1715 = vadd.f32 %v1443, %v1714
        %1716 = vmatmul.bf16.gmra.mxu0 %v1404
        %v1717 = vpop.f32.mrf.mxu0
        %v1718 = vadd.f32 %v1443, %v1717
        %v1719 = vpop.f32.mrf.mxu0
        %v1720 = vadd.f32 %v1443, %v1719
        %1721 = vmatmul.bf16.gmra.mxu0 %v1405
        %v1722 = vpop.f32.mrf.mxu0
        %v1723 = vadd.f32 %v1443, %v1722
        %v1724 = vpop.f32.mrf.mxu0
        %v1725 = vadd.f32 %v1443, %v1724
        %1726 = vmatmul.bf16.gmra.mxu0 %v1406
        %v1727 = vpop.f32.mrf.mxu0
        %v1728 = vadd.f32 %v1443, %v1727
        %v1729 = vpop.f32.mrf.mxu0
        %v1730 = vadd.f32 %v1443, %v1729
        %1731 = vmatmul.bf16.gmra.mxu0 %v1407
        %v1732 = vpop.f32.mrf.mxu0
        %v1733 = vadd.f32 %v1443, %v1732
        %v1734 = vpop.f32.mrf.mxu0
        %v1735 = vadd.f32 %v1443, %v1734
        %1736 = vmatmul.bf16.gmra.mxu0 %v1408
        %v1737 = vpop.f32.mrf.mxu0
        %v1738 = vadd.f32 %v1443, %v1737
        %v1739 = vpop.f32.mrf.mxu0
        %v1740 = vadd.f32 %v1443, %v1739
        %1741 = vmatmul.bf16.gmra.mxu0 %v1409
        %v1742 = vpop.f32.mrf.mxu0
        %v1743 = vadd.f32 %v1443, %v1742
        %v1744 = vpop.f32.mrf.mxu0
        %v1745 = vadd.f32 %v1443, %v1744
        %1746 = vmatmul.bf16.gmra.mxu0 %v1410
        %v1747 = vpop.f32.mrf.mxu0
        %v1748 = vadd.f32 %v1443, %v1747
        %v1749 = vpop.f32.mrf.mxu0
        %v1750 = vadd.f32 %v1443, %v1749
        %1751 = vmatmul.bf16.gmra.mxu0 %v1411
        %v1752 = vpop.f32.mrf.mxu0
        %v1753 = vadd.f32 %v1443, %v1752
        %v1754 = vpop.f32.mrf.mxu0
        %v1755 = vadd.f32 %v1443, %v1754
        %1756 = vmatmul.bf16.gmra.mxu0 %v1412
        %v1757 = vpop.f32.mrf.mxu0
        %v1758 = vadd.f32 %v1443, %v1757
        %v1759 = vpop.f32.mrf.mxu0
        %v1760 = vadd.f32 %v1443, %v1759
        %1761 = vmatmul.bf16.gmra.mxu0 %v1413
        %v1762 = vpop.f32.mrf.mxu0
        %v1763 = vadd.f32 %v1443, %v1762
        %v1764 = vpop.f32.mrf.mxu0
        %v1765 = vadd.f32 %v1443, %v1764
        %1766 = vmatmul.bf16.gmra.mxu0 %v1414
        %v1767 = vpop.f32.mrf.mxu0
        %v1768 = vadd.f32 %v1443, %v1767
        %v1769 = vpop.f32.mrf.mxu0
        %v1770 = vadd.f32 %v1443, %v1769
        %1771 = vmatmul.bf16.gmra.mxu0 %v1415
        %v1772 = vpop.f32.mrf.mxu0
        %v1773 = vadd.f32 %v1443, %v1772
        %v1774 = vpop.f32.mrf.mxu0
        %v1775 = vadd.f32 %v1443, %v1774
        %1776 = vmatmul.bf16.gmra.mxu0 %v1416
        %v1777 = vpop.f32.mrf.mxu0
        %v1778 = vadd.f32 %v1443, %v1777
        %v1779 = vpop.f32.mrf.mxu0
        %v1780 = vadd.f32 %v1443, %v1779
        %1781 = vmatmul.bf16.gmra.mxu0 %v1417
        %v1782 = vpop.f32.mrf.mxu0
        %v1783 = vadd.f32 %v1443, %v1782
        %v1784 = vpop.f32.mrf.mxu0
        %v1785 = vadd.f32 %v1443, %v1784
        %1786 = vmatmul.bf16.gmra.mxu0 %v1418
        %v1787 = vpop.f32.mrf.mxu0
        %v1788 = vadd.f32 %v1443, %v1787
        %v1789 = vpop.f32.mrf.mxu0
        %v1790 = vadd.f32 %v1443, %v1789
        %1791 = vmatmul.bf16.gmra.mxu0 %v1419
        %v1792 = vpop.f32.mrf.mxu0
        %v1793 = vadd.f32 %v1443, %v1792
        %v1794 = vpop.f32.mrf.mxu0
        %v1795 = vadd.f32 %v1443, %v1794
        %1796 = vmatmul.bf16.gmra.mxu0 %v1420
        %v1797 = vpop.f32.mrf.mxu0
        %v1798 = vadd.f32 %v1443, %v1797
        %v1799 = vpop.f32.mrf.mxu0
        %v1800 = vadd.f32 %v1443, %v1799
        %1801 = vmatmul.bf16.gmra.mxu0 %v1421
        %v1802 = vpop.f32.mrf.mxu0
        %v1803 = vadd.f32 %v1443, %v1802
        %v1804 = vpop.f32.mrf.mxu0
        %v1805 = vadd.f32 %v1443, %v1804
        %1806 = vmatmul.bf16.gmra.mxu0 %v1422
        %v1807 = vpop.f32.mrf.mxu0
        %v1808 = vadd.f32 %v1443, %v1807
        %v1809 = vpop.f32.mrf.mxu0
        %v1810 = vadd.f32 %v1443, %v1809
        %1811 = vmatmul.bf16.gmra.mxu0 %v1423
        %v1812 = vpop.f32.mrf.mxu0
        %v1813 = vadd.f32 %v1443, %v1812
        %v1814 = vpop.f32.mrf.mxu0
        %v1815 = vadd.f32 %v1443, %v1814
        %1816 = vmatmul.bf16.gmra.mxu0 %v1424
        %v1817 = vpop.f32.mrf.mxu0
        %v1818 = vadd.f32 %v1443, %v1817
        %v1819 = vpop.f32.mrf.mxu0
        %v1820 = vadd.f32 %v1443, %v1819
        %1821 = vdwg.mxu0
        %1822 = vst [vmem:[%s218] sm:$0xff] %v1503
        %1823 = vst [vmem:[%s218 + $0x8] sm:$0xff] %v1505
        %1824 = vst [vmem:[%s218 + $0x10] sm:$0xff] %v1508
        %1825 = vst [vmem:[%s218 + $0x18] sm:$0xff] %v1510
        %1826 = vst [vmem:[%s218 + $0x20] sm:$0xff] %v1513
        %1827 = vst [vmem:[%s218 + $0x28] sm:$0xff] %v1515
        %1828 = vst [vmem:[%s218 + $0x30] sm:$0xff] %v1518
        %1829 = vst [vmem:[%s218 + $0x38] sm:$0xff] %v1520
        %1830 = vst [vmem:[%s218 + $0x40] sm:$0xff] %v1523
        %1831 = vst [vmem:[%s218 + $0x48] sm:$0xff] %v1525
        %1832 = vst [vmem:[%s218 + $0x50] sm:$0xff] %v1528
        %1833 = vst [vmem:[%s218 + $0x58] sm:$0xff] %v1530
        %1834 = vst [vmem:[%s218 + $0x60] sm:$0xff] %v1533
        %1835 = vst [vmem:[%s218 + $0x68] sm:$0xff] %v1535
        %1836 = vst [vmem:[%s218 + $0x70] sm:$0xff] %v1538
        %1837 = vst [vmem:[%s218 + $0x78] sm:$0xff] %v1540
        %1838 = vst [vmem:[%s218 + $0x80] sm:$0xff] %v1543
        %1839 = vst [vmem:[%s218 + $0x88] sm:$0xff] %v1545
        %1840 = vst [vmem:[%s218 + $0x90] sm:$0xff] %v1548
        %1841 = vst [vmem:[%s218 + $0x98] sm:$0xff] %v1550
        %1842 = vst [vmem:[%s218 + $0xa0] sm:$0xff] %v1553
        %1843 = vst [vmem:[%s218 + $0xa8] sm:$0xff] %v1555
        %1844 = vst [vmem:[%s218 + $0xb0] sm:$0xff] %v1558
        %1845 = vst [vmem:[%s218 + $0xb8] sm:$0xff] %v1560
        %1846 = vst [vmem:[%s218 + $0xc0] sm:$0xff] %v1563
        %1847 = vst [vmem:[%s218 + $0xc8] sm:$0xff] %v1565
        %1848 = vst [vmem:[%s218 + $0xd0] sm:$0xff] %v1568
        %1849 = vst [vmem:[%s218 + $0xd8] sm:$0xff] %v1570
        %1850 = vst [vmem:[%s218 + $0xe0] sm:$0xff] %v1573
        %1851 = vst [vmem:[%s218 + $0xe8] sm:$0xff] %v1575
        %1852 = vst [vmem:[%s218 + $0xf0] sm:$0xff] %v1578
        %1853 = vst [vmem:[%s218 + $0xf8] sm:$0xff] %v1580
        %1854 = vst [vmem:[%s218 + $0x100] sm:$0xff] %v1583
        %1855 = vst [vmem:[%s218 + $0x108] sm:$0xff] %v1585
        %1856 = vst [vmem:[%s218 + $0x110] sm:$0xff] %v1588
        %1857 = vst [vmem:[%s218 + $0x118] sm:$0xff] %v1590
        %1858 = vst [vmem:[%s218 + $0x120] sm:$0xff] %v1593
        %1859 = vst [vmem:[%s218 + $0x128] sm:$0xff] %v1595
        %1860 = vst [vmem:[%s218 + $0x130] sm:$0xff] %v1598
        %1861 = vst [vmem:[%s218 + $0x138] sm:$0xff] %v1600
        %1862 = vst [vmem:[%s218 + $0x140] sm:$0xff] %v1603
        %1863 = vst [vmem:[%s218 + $0x148] sm:$0xff] %v1605
        %1864 = vst [vmem:[%s218 + $0x150] sm:$0xff] %v1608
        %1865 = vst [vmem:[%s218 + $0x158] sm:$0xff] %v1610
        %1866 = vst [vmem:[%s218 + $0x160] sm:$0xff] %v1613
        %1867 = vst [vmem:[%s218 + $0x168] sm:$0xff] %v1615
        %1868 = vst [vmem:[%s218 + $0x170] sm:$0xff] %v1618
        %1869 = vst [vmem:[%s218 + $0x178] sm:$0xff] %v1620
        %1870 = vst [vmem:[%s218 + $0x180] sm:$0xff] %v1623
        %1871 = vst [vmem:[%s218 + $0x188] sm:$0xff] %v1625
        %1872 = vst [vmem:[%s218 + $0x190] sm:$0xff] %v1628
        %1873 = vst [vmem:[%s218 + $0x198] sm:$0xff] %v1630
        %1874 = vst [vmem:[%s218 + $0x1a0] sm:$0xff] %v1633
        %1875 = vst [vmem:[%s218 + $0x1a8] sm:$0xff] %v1635
        %1876 = vst [vmem:[%s218 + $0x1b0] sm:$0xff] %v1638
        %1877 = vst [vmem:[%s218 + $0x1b8] sm:$0xff] %v1640
        %1878 = vst [vmem:[%s218 + $0x1c0] sm:$0xff] %v1643
        %1879 = vst [vmem:[%s218 + $0x1c8] sm:$0xff] %v1645
        %1880 = vst [vmem:[%s218 + $0x1d0] sm:$0xff] %v1648
        %1881 = vst [vmem:[%s218 + $0x1d8] sm:$0xff] %v1650
        %1882 = vst [vmem:[%s218 + $0x1e0] sm:$0xff] %v1653
        %1883 = vst [vmem:[%s218 + $0x1e8] sm:$0xff] %v1655
        %1884 = vst [vmem:[%s218 + $0x1f0] sm:$0xff] %v1658
        %1885 = vst [vmem:[%s218 + $0x1f8] sm:$0xff] %v1660
        %1886 = vst [vmem:[%s218 + $0x200] sm:$0xff] %v1663
        %1887 = vst [vmem:[%s218 + $0x208] sm:$0xff] %v1665
        %1888 = vst [vmem:[%s218 + $0x210] sm:$0xff] %v1668
        %1889 = vst [vmem:[%s218 + $0x218] sm:$0xff] %v1670
        %1890 = vst [vmem:[%s218 + $0x220] sm:$0xff] %v1673
        %1891 = vst [vmem:[%s218 + $0x228] sm:$0xff] %v1675
        %1892 = vst [vmem:[%s218 + $0x230] sm:$0xff] %v1678
        %1893 = vst [vmem:[%s218 + $0x238] sm:$0xff] %v1680
        %1894 = vst [vmem:[%s218 + $0x240] sm:$0xff] %v1683
        %1895 = vst [vmem:[%s218 + $0x248] sm:$0xff] %v1685
        %1896 = vst [vmem:[%s218 + $0x250] sm:$0xff] %v1688
        %1897 = vst [vmem:[%s218 + $0x258] sm:$0xff] %v1690
        %1898 = vst [vmem:[%s218 + $0x260] sm:$0xff] %v1693
        %1899 = vst [vmem:[%s218 + $0x268] sm:$0xff] %v1695
        %1900 = vst [vmem:[%s218 + $0x270] sm:$0xff] %v1698
        %1901 = vst [vmem:[%s218 + $0x278] sm:$0xff] %v1700
        %1902 = vst [vmem:[%s218 + $0x280] sm:$0xff] %v1703
        %1903 = vst [vmem:[%s218 + $0x288] sm:$0xff] %v1705
        %1904 = vst [vmem:[%s218 + $0x290] sm:$0xff] %v1708
        %1905 = vst [vmem:[%s218 + $0x298] sm:$0xff] %v1710
        %1906 = vst [vmem:[%s218 + $0x2a0] sm:$0xff] %v1713
        %1907 = vst [vmem:[%s218 + $0x2a8] sm:$0xff] %v1715
        %1908 = vst [vmem:[%s218 + $0x2b0] sm:$0xff] %v1718
        %1909 = vst [vmem:[%s218 + $0x2b8] sm:$0xff] %v1720
        %1910 = vst [vmem:[%s218 + $0x2c0] sm:$0xff] %v1723
        %1911 = vst [vmem:[%s218 + $0x2c8] sm:$0xff] %v1725
        %1912 = vst [vmem:[%s218 + $0x2d0] sm:$0xff] %v1728
        %1913 = vst [vmem:[%s218 + $0x2d8] sm:$0xff] %v1730
        %1914 = vst [vmem:[%s218 + $0x2e0] sm:$0xff] %v1733
        %1915 = vst [vmem:[%s218 + $0x2e8] sm:$0xff] %v1735
        %1916 = vst [vmem:[%s218 + $0x2f0] sm:$0xff] %v1738
        %1917 = vst [vmem:[%s218 + $0x2f8] sm:$0xff] %v1740
        %1918 = vst [vmem:[%s218 + $0x300] sm:$0xff] %v1743
        %1919 = vst [vmem:[%s218 + $0x308] sm:$0xff] %v1745
        %1920 = vst [vmem:[%s218 + $0x310] sm:$0xff] %v1748
        %1921 = vst [vmem:[%s218 + $0x318] sm:$0xff] %v1750
        %1922 = vst [vmem:[%s218 + $0x320] sm:$0xff] %v1753
        %1923 = vst [vmem:[%s218 + $0x328] sm:$0xff] %v1755
        %1924 = vst [vmem:[%s218 + $0x330] sm:$0xff] %v1758
        %1925 = vst [vmem:[%s218 + $0x338] sm:$0xff] %v1760
        %1926 = vst [vmem:[%s218 + $0x340] sm:$0xff] %v1763
        %1927 = vst [vmem:[%s218 + $0x348] sm:$0xff] %v1765
        %1928 = vst [vmem:[%s218 + $0x350] sm:$0xff] %v1768
        %1929 = vst [vmem:[%s218 + $0x358] sm:$0xff] %v1770
        %1930 = vst [vmem:[%s218 + $0x360] sm:$0xff] %v1773
        %1931 = vst [vmem:[%s218 + $0x368] sm:$0xff] %v1775
        %1932 = vst [vmem:[%s218 + $0x370] sm:$0xff] %v1778
        %1933 = vst [vmem:[%s218 + $0x378] sm:$0xff] %v1780
        %1934 = vst [vmem:[%s218 + $0x380] sm:$0xff] %v1783
        %1935 = vst [vmem:[%s218 + $0x388] sm:$0xff] %v1785
        %1936 = vst [vmem:[%s218 + $0x390] sm:$0xff] %v1788
        %1937 = vst [vmem:[%s218 + $0x398] sm:$0xff] %v1790
        %1938 = vst [vmem:[%s218 + $0x3a0] sm:$0xff] %v1793
        %1939 = vst [vmem:[%s218 + $0x3a8] sm:$0xff] %v1795
        %1940 = vst [vmem:[%s218 + $0x3b0] sm:$0xff] %v1798
        %1941 = vst [vmem:[%s218 + $0x3b8] sm:$0xff] %v1800
        %1942 = vst [vmem:[%s218 + $0x3c0] sm:$0xff] %v1803
        %1943 = vst [vmem:[%s218 + $0x3c8] sm:$0xff] %v1805
        %1944 = vst [vmem:[%s218 + $0x3d0] sm:$0xff] %v1808
        %1945 = vst [vmem:[%s218 + $0x3d8] sm:$0xff] %v1810
        %1946 = vst [vmem:[%s218 + $0x3e0] sm:$0xff] %v1813
        %1947 = vst [vmem:[%s218 + $0x3e8] sm:$0xff] %v1815
        %1948 = vst [vmem:[%s218 + $0x3f0] sm:$0xff] %v1818
        %1949 = vst [vmem:[%s218 + $0x3f8] sm:$0xff] %v1820
        %s1950 = sand.u32 %s137, 1
        %s1951 = scalar_lea.sflag [#allocation3], %s1950
        %s1952 = sand.u32 %s137, 1
        %s1953 = smul.addr %s1952, 1024
        %s1954 = scalar_lea.vmem [#allocation2], %s1953
        // Predicated region
        $region41: #{tpu_custom_call.1} parent=39 // pred_check
          %p1955 = pneg %p147
        $region42: #{tpu_custom_call.1} parent=39 // pred_check_branch
          %1957 = sbr.rel (%p1955) target = $region44
        $region43: #{tpu_custom_call.1} parent=39 // pred_region
          %s1958 = smul.u32 128, %s19
          %1960 = vsyncadd %s1951, 0
          %s1961 = smul.addr %s1958, 8
          %s1962 = scalar_lea.hbm %s5, %s1961
          %s1963 = sshll.u32 %s1954, 4
          %s1964 = int_to_ptr.vmem [resolvable:$true] %s1963
          %s1965 = sshll.u32 %s1962, 4
          %s1966 = int_to_ptr.hbm [resolvable:$true] %s1965
          %1971 = dma.vmem_to_hbm [thread:$0]  %s1964, 16384, %s1966, %s1951, 128, 128, 8
        $region44: #{tpu_custom_call.1} parent=39 // pred_fallthru
          _
      $region40: #{tpu_custom_call.1} parent=5 // pred_fallthru
        _
      %p1972 = scmp.le.s32.totalorder 2, %s14
      // Predicated region
      $region45: #{tpu_custom_call.1} parent=5 // pred_check
        %p1973 = pneg %p1972
      $region46: #{tpu_custom_call.1} parent=5 // pred_check_branch
        %1975 = sbr.rel (%p1973) target = $region48
      $region47: #{tpu_custom_call.1} parent=5 // pred_region
        %s1976 = ssub.s32 %s14, 2
        // Predicated region
        $region49: #{tpu_custom_call.1} parent=47 // pred_check
          %p1977 = pneg %p153
        $region50: #{tpu_custom_call.1} parent=47 // pred_check_branch
          %1979 = sbr.rel (%p1977) target = $region52
        $region51: #{tpu_custom_call.1} parent=47 // pred_region
          %s1980 = sand.u32 %s138, 1
          %s1981 = scalar_lea.sflag [#allocation3], %s1980
          %s1982 = sand.u32 %s138, 1
          %s1983 = smul.addr %s1982, 1024
          %s1984 = scalar_lea.vmem [#allocation2], %s1983
          %1986 = dma.done %s1981, 16384
        $region52: #{tpu_custom_call.1} parent=47 // pred_fallthru
          _
      $region48: #{tpu_custom_call.1} parent=5 // pred_fallthru
        _
    $region6: #{tpu_custom_call.1} parent=1 // loop_footer
      %s18 = sadd.s32 1, %s14
    $region7: #{tpu_custom_call.1} parent=1 // loop_footer_branch
      %13 = sbr.rel target = $region3
    $region8: #{tpu_custom_call.1} parent=1 // loop_exit
      _
    %1987 = vsyncpa [#allocation3], 1
    %s1988 = scalar_lea.sflag [#allocation3], 1
    %1989 = vsyncpa %s1988, 1

</llo_original>
